<compile_context>
chip_gen: v7x
topology: tpu7x:2x2x1
jax: 0.10.0
libtpu: 0.0.40
codegen_flags: <defaults>
</compile_context>

<pallas_src>
import math

import jax
import jax.numpy as jnp
import numpy as np
from jax.experimental import pallas as pl
from jax.experimental.pallas import tpu as pltpu


# ---------------------------------------------------------------------------
# Helpers
# ---------------------------------------------------------------------------
def _vmem_limit_bytes():
    """Generation-aware VMEM limit: <= 3/4 of physical per-core VMEM."""
    cap = None
    try:
        cap = getattr(pltpu.get_tpu_info(), "vmem_capacity_bytes", None)
    except Exception:
        cap = None
    if not cap:
        cap = 64 * 1024 * 1024          # assume the smallest (v7x) if unknown
    return int(min(96 * 1024 * 1024, (cap * 3) // 4))


def _head_group_size(n_head, head_dim):
    """Largest divisor of n_head with group*head_dim <= 128 (heads per grid step)."""
    cap = max(1, 128 // head_dim) if head_dim < 128 else 1
    for cand in range(min(n_head, cap), 0, -1):
        if n_head % cand == 0:
            return cand
    return 1


# ---------------------------------------------------------------------------
# Kernel 1: fused per-head QKV projection (single MXU call) + rotary embedding
#           outputs: q (B,H,S,D), K^T (B,H,D,S), v (B,H,S,D), all bf16
# ---------------------------------------------------------------------------
def make_qkv_rope_kernel(head_dim: int, rotary_dim: int):
    D, R = head_dim, rotary_dim
    half = R // 2

    def kernel(x_ref, w_ref, b_ref, cos_ref, sin_ref, q_out, kT_out, v_out):
        # x_ref: (1, TQ, E); w_ref: (1, E, 3D) bf16; b_ref: (1, 1, 3D) f32
        xb = x_ref[0].astype(jnp.bfloat16)                        # (TQ, E)
        r = jnp.dot(xb, w_ref[0],
                    preferred_element_type=jnp.float32) + b_ref[0]  # (TQ, 3D) f32
        q = r[:, 0 * D:1 * D]
        k = r[:, 1 * D:2 * D]
        v = r[:, 2 * D:3 * D]

        cos = cos_ref[...]                                        # (TQ, R//2) f32
        sin = sin_ref[...]

        def rope(a):                                              # pure vreg math
            a1 = a[:, :half]
            a2 = a[:, half:R]
            rot = jnp.concatenate([a1 * cos - a2 * sin,
                                   a1 * sin + a2 * cos], axis=-1)
            if R < D:
                rot = jnp.concatenate([rot, a[:, R:]], axis=-1)
            return rot

        q_out[0, 0] = rope(q).astype(q_out.dtype)                 # (TQ, D)
        kT_out[0, 0] = rope(k).T.astype(kT_out.dtype)             # (D, TQ) pre-transposed
        v_out[0, 0] = v.astype(v_out.dtype)                       # (TQ, D)

    return kernel


# ---------------------------------------------------------------------------
# Kernel 2: flash-style causal attention over g heads per step + fused out-proj
#           accumulated directly into the resident o_ref block.
# ---------------------------------------------------------------------------
def make_flash_attn_outproj_kernel():
    def kernel(q_ref, kT_ref, v_ref, wo_ref, bo_ref, o_ref, m_scr, l_scr, acc_scr):
        # q_ref: (1,g,TQ,D) bf16 ; kT_ref: (1,g,D,TK) bf16 ; v_ref: (1,g,TK,D) bf16
        # wo_ref: (1,g,D,E) bf16 ; bo_ref: (1,E) f32 ; o_ref: (1,TQ,E)
        qi = pl.program_id(1)
        hg = pl.program_id(2)
        kj = pl.program_id(3)
        nk = pl.num_programs(3)
        g = q_ref.shape[1]
        TQ = q_ref.shape[2]
        TK = kT_ref.shape[3]

        @pl.when(kj == 0)
        def _init():
            m_scr[...] = jnp.full_like(m_scr, -jnp.inf)
            l_scr[...] = jnp.zeros_like(l_scr)
            acc_scr[...] = jnp.zeros_like(acc_scr)

        q_start = qi * TQ
        k_start = kj * TK

        # Compute only KV tiles that intersect the causal region of this q tile.
        # (the matching index_map clamp already prevents the DMA for skipped tiles)
        @pl.when(k_start <= q_start + TQ - 1)
        def _compute():
            q = q_ref[0]                                          # (g, TQ, D) (scale folded in Wq)
            kT = kT_ref[0]                                        # (g, D, TK)
            s = jax.lax.dot_general(q, kT, (((2,), (1,)), ((0,), (0,))),
                                    preferred_element_type=jnp.float32)  # (g,TQ,TK)

            # torch semantics: additive -10000 above the diagonal (in f32).
            # constant iota-difference vs. a scalar (cheap per-tile mask).
            offs = (jax.lax.broadcasted_iota(jnp.int32, (TQ, TK), 1)
                    - jax.lax.broadcasted_iota(jnp.int32, (TQ, TK), 0))
            s = jnp.where(offs[None, :, :] > (q_start - k_start), s - 10000.0, s)

            m_prev = m_scr[...]
            m_new = jnp.maximum(m_prev, s.max(axis=-1, keepdims=True))
            alpha = jnp.exp(m_prev - m_new)
            p = jnp.exp(s - m_new)
            l_scr[...] = alpha * l_scr[...] + p.sum(axis=-1, keepdims=True)
            acc_scr[...] = alpha * acc_scr[...] + jax.lax.dot_general(
                p.astype(jnp.bfloat16), v_ref[0], (((2,), (1,)), ((0,), (0,))),
                preferred_element_type=jnp.float32)               # (g, TQ, D)
            m_scr[...] = m_new

        @pl.when(kj == nk - 1)
        def _finalize():
            inv_l = pl.reciprocal(l_scr[...], approx=True)        # EUP, free slot
            ctx = (acc_scr[...] * inv_l).astype(jnp.bfloat16)     # (g, TQ, D)

            contrib = None                                        # per-group out-proj
            for i in range(g):                                    # static unroll
                c = jnp.dot(ctx[i], wo_ref[0, i],
                            preferred_element_type=jnp.float32)   # (TQ, E)
                contrib = c if contrib is None else contrib + c

            # Accumulate straight into the resident output block (f32, lane-dense).
            @pl.when(hg == 0)
            def _():
                o_ref[0] = (bo_ref[...] + contrib).astype(o_ref.dtype)

            @pl.when(hg != 0)
            def _():
                o_ref[0] = (o_ref[0].astype(jnp.float32) + contrib).astype(o_ref.dtype)

    return kernel


# ---------------------------------------------------------------------------
# Wrapper
# ---------------------------------------------------------------------------
def mha_forward(x, wqkv, bqkv, wout, bout, *, n_head, head_dim, rotary_dim,
                rotary_base=10000.0, softmax_scale=None,
                q_block=256, kv_block=256):
    """x: (B, S, E) float32. Weights in PyTorch nn.Linear convention:
       wqkv: (3*H*D, E), bqkv: (3*H*D,), wout: (E, H*D), bout: (E,)."""
    B, S, E = x.shape
    H, D, R = n_head, head_dim, rotary_dim
    assert 0 < R <= D and R % 2 == 0
    half = R // 2
    scale = softmax_scale if softmax_scale is not None else 1.0 / math.sqrt(D)

    # Larger tiles cut K/V + W_out re-streaming (the dominant HBM term at long S).
    # On v5e prefer 128; on v7x re-derive against the 64 MiB VMEM budget.
    TQ = min(q_block, S)
    TK = min(kv_block, S)
    assert S % TQ == 0 and S % TK == 0, "seqlen must be divisible by the tile sizes"
    g = _head_group_size(H, D)                                    # heads per kernel-2 step

    # RoPE cos/sin tables (matches RotaryEmbedding._update_cos_sin_cache).
    inv_freq = 1.0 / (rotary_base ** (jnp.arange(0, R, 2, dtype=jnp.float32) / R))
    t = jnp.arange(S, dtype=jnp.float32)
    freqs = jnp.outer(t, inv_freq)                                # (S, R//2)
    cos = jnp.cos(freqs).astype(jnp.float32)
    sin = jnp.sin(freqs).astype(jnp.float32)

    # Wqkv output features are ordered (three, head, dim).  Fuse q/k/v into one
    # per-head (E, 3D) weight (single MXU call in kernel 1) and fold the softmax
    # scale into Wq / bq (RoPE is linear, so pre-scaling is exact).
    w3 = wqkv.reshape(3, H, D, E)
    b3 = bqkv.reshape(3, H, D)
    wq_h = jnp.transpose(w3[0] * scale, (0, 2, 1))                # (H, E, D)
    wk_h = jnp.transpose(w3[1], (0, 2, 1))
    wv_h = jnp.transpose(w3[2], (0, 2, 1))
    w_fused = jnp.concatenate([wq_h, wk_h, wv_h], axis=-1).astype(jnp.bfloat16)  # (H,E,3D)
    b_fused = jnp.concatenate([b3[0] * scale, b3[1], b3[2]],
                              axis=-1).reshape(H, 1, 3 * D).astype(jnp.float32)  # (H,1,3D)

    wo = wout.T.reshape(H // g, g, D, E).astype(jnp.bfloat16)     # grouped (Hg, g, D, E)
    bo = bout.reshape(1, E).astype(jnp.float32)

    vmem_limit = _vmem_limit_bytes()

    def run(single_buffer_weights):
        def wspec(shape, index_map):
            # Weight/bias blocks are invariant over the inner grid axes: a second
            # pipeline buffer buys no overlap but doubles their VMEM footprint.
            if single_buffer_weights:
                return pl.BlockSpec(shape, index_map, pipeline_mode=pl.Buffered(1))
            return pl.BlockSpec(shape, index_map)

        # ---- kernel 1: fused QKV projection + RoPE -> q/(K^T)/v ----
        # heads outermost: projection weights DMA'd once per head, not per (b, q-tile).
        # (for head_dim < ~2/3*TQ the (B, q-tile, H) order streams slightly less; the
        #  kernel-1 term is second-order vs. kernel-2 K/V traffic at long S.)
        q_r, kT_r, v_r = pl.pallas_call(
            make_qkv_rope_kernel(D, R),
            out_shape=(
                jax.ShapeDtypeStruct((B, H, S, D), jnp.bfloat16),
                jax.ShapeDtypeStruct((B, H, D, S), jnp.bfloat16),
                jax.ShapeDtypeStruct((B, H, S, D), jnp.bfloat16),
            ),
            grid=(H, B, S // TQ),
            in_specs=[
                pl.BlockSpec((1, TQ, E), lambda h, b, qi: (b, qi, 0)),
                wspec((1, E, 3 * D), lambda h, b, qi: (h, 0, 0)),
                wspec((1, 1, 3 * D), lambda h, b, qi: (h, 0, 0)),
                pl.BlockSpec((TQ, half), lambda h, b, qi: (qi, 0)),
                pl.BlockSpec((TQ, half), lambda h, b, qi: (qi, 0)),
            ],
            out_specs=(
                pl.BlockSpec((1, 1, TQ, D), lambda h, b, qi: (b, h, qi, 0)),
                pl.BlockSpec((1, 1, D, TQ), lambda h, b, qi: (b, h, 0, qi)),
                pl.BlockSpec((1, 1, TQ, D), lambda h, b, qi: (b, h, qi, 0)),
            ),
            compiler_params=pltpu.CompilerParams(
                dimension_semantics=("parallel", "parallel", "parallel"),
                vmem_limit_bytes=vmem_limit),
        )(x, w_fused, b_fused, cos, sin)

        # ---- kernel 2: flash attention (g heads / step) + fused output projection ----
        # Causal DMA clamp: fully-masked KV tiles map to the last valid tile for this
        # q tile, so no fresh DMA is issued for them (compute is skipped by pl.when).
        def kT_index(b, qi, hg, kj):
            return (b, hg, 0, jnp.minimum(kj, (qi * TQ + TQ - 1) // TK))

        def v_index(b, qi, hg, kj):
            return (b, hg, jnp.minimum(kj, (qi * TQ + TQ - 1) // TK), 0)

        out = pl.pallas_call(
            make_flash_attn_outproj_kernel(),
            out_shape=jax.ShapeDtypeStruct((B, S, E), x.dtype),
            grid=(B, S // TQ, H // g, S // TK),
            in_specs=[
                pl.BlockSpec((1, g, TQ, D), lambda b, qi, hg, kj: (b, hg, qi, 0)),
                pl.BlockSpec((1, g, D, TK), kT_index),
                pl.BlockSpec((1, g, TK, D), v_index),
                wspec((1, g, D, E), lambda b, qi, hg, kj: (hg, 0, 0, 0)),
                wspec((1, E), lambda b, qi, hg, kj: (0, 0)),
            ],
            out_specs=pl.BlockSpec((1, TQ, E), lambda b, qi, hg, kj: (b, qi, 0)),
            scratch_shapes=[
                pltpu.VMEM((g, TQ, 1), jnp.float32),   # running max
                pltpu.VMEM((g, TQ, 1), jnp.float32),   # running sum
                pltpu.VMEM((g, TQ, D), jnp.float32),   # per-head context accumulator
            ],
            compiler_params=pltpu.CompilerParams(
                dimension_semantics=("parallel", "parallel", "arbitrary", "arbitrary"),
                vmem_limit_bytes=vmem_limit),
        )(q_r, kT_r, v_r, wo, bo)
        return out

    try:
        out = run(True)
        jax.block_until_ready(out)
        return out
    except Exception:
        # TODO(synk): drop fallback once pipeline_mode=pl.Buffered(1) is guaranteed
        # available in the deployed JAX; semantics are identical either way.
        return run(False)


# ---------------------------------------------------------------------------
# Pure-JAX reference (mirrors the PyTorch module, dropout=0, causal=True)
# ---------------------------------------------------------------------------
def mha_reference(x, wqkv, bqkv, wout, bout, *, n_head, head_dim, rotary_dim,
                  rotary_base=10000.0):
    B, S, E = x.shape
    H, D, R = n_head, head_dim, rotary_dim
    qkv = x @ wqkv.T + bqkv                                      # (B, S, 3*H*D)
    qkv = qkv.reshape(B, S, 3, H, D)

    inv_freq = 1.0 / (rotary_base ** (jnp.arange(0, R, 2, dtype=jnp.float32) / R))
    t = jnp.arange(S, dtype=jnp.float32)
    freqs = jnp.outer(t, inv_freq)
    cos = jnp.cos(freqs)[:, None, :]                             # (S, 1, R//2)
    sin = jnp.sin(freqs)[:, None, :]

    q, k, v = qkv[:, :, 0], qkv[:, :, 1], qkv[:, :, 2]

    def rope(a):
        a1 = a[..., :R // 2]
        a2 = a[..., R // 2:R]
        a_pass = a[..., R:]
        rot = jnp.concatenate([a1 * cos - a2 * sin, a1 * sin + a2 * cos], axis=-1)
        return jnp.concatenate([rot, a_pass], axis=-1)

    q, k = rope(q), rope(k)
    scale = 1.0 / math.sqrt(D)
    scores = jnp.einsum('bthd,bshd->bhts', q, k * scale)
    mask = jnp.triu(jnp.full((S, S), -10000.0, dtype=jnp.float32), 1)
    scores = scores + mask
    attn = jax.nn.softmax(scores, axis=-1)
    ctx = jnp.einsum('bhts,bshd->bthd', attn, v)
    out = ctx.reshape(B, S, H * D) @ wout.T + bout
    return out


if __name__ == "__main__":
    # config: n_embd=32, n_head=4  ->  head_dim=8, op_size=32, rotary_dim=4
    B, S, E = 2, 8, 32
    H, D, R = 4, 8, 4
    HD = H * D

    key = jax.random.PRNGKey(0)
    kx, kw1, kb1, kw2, kb2 = jax.random.split(key, 5)

    x = jax.random.normal(kx, (B, S, E), dtype=jnp.float32)
    wqkv = 0.05 * jax.random.normal(kw1, (3 * HD, E), dtype=jnp.float32)
    bqkv = 0.05 * jax.random.normal(kb1, (3 * HD,), dtype=jnp.float32)
    wout = 0.05 * jax.random.normal(kw2, (E, HD), dtype=jnp.float32)
    bout = 0.05 * jax.random.normal(kb2, (E,), dtype=jnp.float32)

    out = mha_forward(x, wqkv, bqkv, wout, bout,
                      n_head=H, head_dim=D, rotary_dim=R)
    out = jax.block_until_ready(out)

    ref = mha_reference(x, wqkv, bqkv, wout, bout,
                        n_head=H, head_dim=D, rotary_dim=R)
    # bf16 MXU operands + approx reciprocal -> slightly looser tolerance than f32
    np.testing.assert_allclose(np.asarray(out), np.asarray(ref),
                               rtol=2e-2, atol=2e-2)

    print("KERNEL_OK")
</pallas_src>

<mosaic_0001>
module attributes {stable_mosaic.version = 11 : i64} {
  func.func @kernel(%arg0: i32, %arg1: i32, %arg2: i32, %arg3: memref<1x8x32xf32, #tpu.memory_space<vmem>>, %arg4: memref<1x32x24xbf16, #tpu.memory_space<vmem>>, %arg5: memref<1x1x24xf32, #tpu.memory_space<vmem>>, %arg6: memref<8x2xf32, #tpu.memory_space<vmem>>, %arg7: memref<8x2xf32, #tpu.memory_space<vmem>>, %arg8: memref<1x1x8x8xbf16, #tpu.memory_space<vmem>>, %arg9: memref<1x1x8x8xbf16, #tpu.memory_space<vmem>>, %arg10: memref<1x1x8x8xbf16, #tpu.memory_space<vmem>>) attributes {dimension_semantics = [#tpu.dimension_semantics<parallel>, #tpu.dimension_semantics<parallel>, #tpu.dimension_semantics<parallel>], iteration_bounds = array<i64: 4, 2, 1>, scalar_prefetch = 0 : i64, scratch_operands = 0 : i64, tpu.core_type = #tpu.core_type<tc>, window_params = [{transform_indices = @transform_0, window_bounds = array<i64: 1, 8, 32>}, {pipeline_mode = #tpu.pipeline_mode<synchronous>, transform_indices = @transform_1, window_bounds = array<i64: 1, 32, 24>}, {pipeline_mode = #tpu.pipeline_mode<synchronous>, transform_indices = @transform_2, window_bounds = array<i64: 1, 1, 24>}, {transform_indices = @transform_3, window_bounds = array<i64: 8, 2>}, {transform_indices = @transform_4, window_bounds = array<i64: 8, 2>}, {transform_indices = @transform_5, window_bounds = array<i64: 1, 1, 8, 8>}, {transform_indices = @transform_6, window_bounds = array<i64: 1, 1, 8, 8>}, {transform_indices = @transform_7, window_bounds = array<i64: 1, 1, 8, 8>}]} {
    %c0 = arith.constant 0 : index
    %c0_0 = arith.constant 0 : index
    %c0_1 = arith.constant 0 : index
    %0 = vector.load %arg3[%c0, %c0_0, %c0_1] : memref<1x8x32xf32, #tpu.memory_space<vmem>>, vector<1x8x32xf32>
    %1 = vector.shape_cast %0 : vector<1x8x32xf32> to vector<8x32xf32>
    %2 = arith.truncf %1 : vector<8x32xf32> to vector<8x32xbf16>
    %c0_2 = arith.constant 0 : index
    %c0_3 = arith.constant 0 : index
    %c0_4 = arith.constant 0 : index
    %3 = vector.load %arg4[%c0_2, %c0_3, %c0_4] : memref<1x32x24xbf16, #tpu.memory_space<vmem>>, vector<1x32x24xbf16>
    %4 = vector.shape_cast %3 : vector<1x32x24xbf16> to vector<32x24xbf16>
    %cst = arith.constant dense<0.000000e+00> : vector<8x24xf32>
    %5 = tpu.matmul %2, %4, %cst {dimension_numbers = #tpu.dot_dimension_numbers<[1], [0], [0], [1], [0, 0, 1, 1], [], []>} : vector<8x32xbf16>, vector<32x24xbf16>, vector<8x24xf32> -> vector<8x24xf32>
    %c0_5 = arith.constant 0 : index
    %c0_6 = arith.constant 0 : index
    %c0_7 = arith.constant 0 : index
    %6 = vector.load %arg5[%c0_5, %c0_6, %c0_7] : memref<1x1x24xf32, #tpu.memory_space<vmem>>, vector<1x1x24xf32>
    %7 = vector.shape_cast %6 : vector<1x1x24xf32> to vector<1x24xf32>
    %8 = vector.broadcast %7 : vector<1x24xf32> to vector<8x24xf32>
    %9 = arith.addf %5, %8 : vector<8x24xf32>
    %10 = vector.extract_strided_slice %9 {offsets = [0, 0], sizes = [8, 8], strides = [1, 1]} : vector<8x24xf32> to vector<8x8xf32>
    %11 = vector.extract_strided_slice %9 {offsets = [0, 8], sizes = [8, 8], strides = [1, 1]} : vector<8x24xf32> to vector<8x8xf32>
    %12 = vector.extract_strided_slice %9 {offsets = [0, 16], sizes = [8, 8], strides = [1, 1]} : vector<8x24xf32> to vector<8x8xf32>
    %c0_8 = arith.constant 0 : index
    %c0_9 = arith.constant 0 : index
    %13 = vector.load %arg6[%c0_8, %c0_9] : memref<8x2xf32, #tpu.memory_space<vmem>>, vector<8x2xf32>
    %c0_10 = arith.constant 0 : index
    %c0_11 = arith.constant 0 : index
    %14 = vector.load %arg7[%c0_10, %c0_11] : memref<8x2xf32, #tpu.memory_space<vmem>>, vector<8x2xf32>
    %15 = vector.extract_strided_slice %10 {offsets = [0, 0], sizes = [8, 2], strides = [1, 1]} : vector<8x8xf32> to vector<8x2xf32>
    %16 = vector.extract_strided_slice %10 {offsets = [0, 2], sizes = [8, 2], strides = [1, 1]} : vector<8x8xf32> to vector<8x2xf32>
    %17 = arith.mulf %15, %13 : vector<8x2xf32>
    %18 = arith.mulf %16, %14 : vector<8x2xf32>
    %19 = arith.subf %17, %18 : vector<8x2xf32>
    %20 = arith.mulf %15, %14 : vector<8x2xf32>
    %21 = arith.mulf %16, %13 : vector<8x2xf32>
    %22 = arith.addf %20, %21 : vector<8x2xf32>
    %23 = tpu.concatenate %19, %22 in 1 : vector<8x2xf32>, vector<8x2xf32> -> vector<8x4xf32>
    %24 = vector.extract_strided_slice %10 {offsets = [0, 4], sizes = [8, 4], strides = [1, 1]} : vector<8x8xf32> to vector<8x4xf32>
    %25 = tpu.concatenate %23, %24 in 1 : vector<8x4xf32>, vector<8x4xf32> -> vector<8x8xf32>
    %26 = arith.truncf %25 : vector<8x8xf32> to vector<8x8xbf16>
    %c0_12 = arith.constant 0 : index
    %c0_13 = arith.constant 0 : index
    %c0_14 = arith.constant 0 : index
    %c0_15 = arith.constant 0 : index
    %27 = vector.load %arg8[%c0_12, %c0_13, %c0_14, %c0_15] : memref<1x1x8x8xbf16, #tpu.memory_space<vmem>>, vector<1x1x8x8xbf16>
    %28 = vector.shape_cast %27 : vector<1x1x8x8xbf16> to vector<8x8xbf16>
    %29 = vector.shape_cast %26 : vector<8x8xbf16> to vector<1x1x8x8xbf16>
    tpu.vector_store %arg8[%c0_12, %c0_13, %c0_14, %c0_15], %29 {strides = array<i32>} : memref<1x1x8x8xbf16, #tpu.memory_space<vmem>>, vector<1x1x8x8xbf16>,
    %30 = vector.extract_strided_slice %11 {offsets = [0, 0], sizes = [8, 2], strides = [1, 1]} : vector<8x8xf32> to vector<8x2xf32>
    %31 = vector.extract_strided_slice %11 {offsets = [0, 2], sizes = [8, 2], strides = [1, 1]} : vector<8x8xf32> to vector<8x2xf32>
    %32 = arith.mulf %30, %13 : vector<8x2xf32>
    %33 = arith.mulf %31, %14 : vector<8x2xf32>
    %34 = arith.subf %32, %33 : vector<8x2xf32>
    %35 = arith.mulf %30, %14 : vector<8x2xf32>
    %36 = arith.mulf %31, %13 : vector<8x2xf32>
    %37 = arith.addf %35, %36 : vector<8x2xf32>
    %38 = tpu.concatenate %34, %37 in 1 : vector<8x2xf32>, vector<8x2xf32> -> vector<8x4xf32>
    %39 = vector.extract_strided_slice %11 {offsets = [0, 4], sizes = [8, 4], strides = [1, 1]} : vector<8x8xf32> to vector<8x4xf32>
    %40 = tpu.concatenate %38, %39 in 1 : vector<8x4xf32>, vector<8x4xf32> -> vector<8x8xf32>
    %41 = tpu.transpose %40, [1, 0] : vector<8x8xf32> -> vector<8x8xf32>
    %42 = arith.truncf %41 : vector<8x8xf32> to vector<8x8xbf16>
    %c0_16 = arith.constant 0 : index
    %c0_17 = arith.constant 0 : index
    %c0_18 = arith.constant 0 : index
    %c0_19 = arith.constant 0 : index
    %43 = vector.load %arg9[%c0_16, %c0_17, %c0_18, %c0_19] : memref<1x1x8x8xbf16, #tpu.memory_space<vmem>>, vector<1x1x8x8xbf16>
    %44 = vector.shape_cast %43 : vector<1x1x8x8xbf16> to vector<8x8xbf16>
    %45 = vector.shape_cast %42 : vector<8x8xbf16> to vector<1x1x8x8xbf16>
    tpu.vector_store %arg9[%c0_16, %c0_17, %c0_18, %c0_19], %45 {strides = array<i32>} : memref<1x1x8x8xbf16, #tpu.memory_space<vmem>>, vector<1x1x8x8xbf16>,
    %46 = arith.truncf %12 : vector<8x8xf32> to vector<8x8xbf16>
    %c0_20 = arith.constant 0 : index
    %c0_21 = arith.constant 0 : index
    %c0_22 = arith.constant 0 : index
    %c0_23 = arith.constant 0 : index
    %47 = vector.load %arg10[%c0_20, %c0_21, %c0_22, %c0_23] : memref<1x1x8x8xbf16, #tpu.memory_space<vmem>>, vector<1x1x8x8xbf16>
    %48 = vector.shape_cast %47 : vector<1x1x8x8xbf16> to vector<8x8xbf16>
    %49 = vector.shape_cast %46 : vector<8x8xbf16> to vector<1x1x8x8xbf16>
    tpu.vector_store %arg10[%c0_20, %c0_21, %c0_22, %c0_23], %49 {strides = array<i32>} : memref<1x1x8x8xbf16, #tpu.memory_space<vmem>>, vector<1x1x8x8xbf16>,
    return
  }
  func.func @transform_0(%arg0: i32, %arg1: i32, %arg2: i32) -> (i32, i32, i32) {
    %c0_i32 = arith.constant 0 : i32
    %c0_i32_0 = arith.constant 0 : i32
    return %arg1, %arg2, %c0_i32 : i32, i32, i32
  }
  func.func @transform_1(%arg0: i32, %arg1: i32, %arg2: i32) -> (i32, i32, i32) {
    %c0_i32 = arith.constant 0 : i32
    %c0_i32_0 = arith.constant 0 : i32
    %c0_i32_1 = arith.constant 0 : i32
    return %arg0, %c0_i32, %c0_i32_0 : i32, i32, i32
  }
  func.func @transform_2(%arg0: i32, %arg1: i32, %arg2: i32) -> (i32, i32, i32) {
    %c0_i32 = arith.constant 0 : i32
    %c0_i32_0 = arith.constant 0 : i32
    %c0_i32_1 = arith.constant 0 : i32
    return %arg0, %c0_i32, %c0_i32_0 : i32, i32, i32
  }
  func.func @transform_3(%arg0: i32, %arg1: i32, %arg2: i32) -> (i32, i32) {
    %c0_i32 = arith.constant 0 : i32
    %c0_i32_0 = arith.constant 0 : i32
    return %arg2, %c0_i32 : i32, i32
  }
  func.func @transform_4(%arg0: i32, %arg1: i32, %arg2: i32) -> (i32, i32) {
    %c0_i32 = arith.constant 0 : i32
    %c0_i32_0 = arith.constant 0 : i32
    return %arg2, %c0_i32 : i32, i32
  }
  func.func @transform_5(%arg0: i32, %arg1: i32, %arg2: i32) -> (i32, i32, i32, i32) {
    %c0_i32 = arith.constant 0 : i32
    %c0_i32_0 = arith.constant 0 : i32
    return %arg1, %arg0, %arg2, %c0_i32 : i32, i32, i32, i32
  }
  func.func @transform_6(%arg0: i32, %arg1: i32, %arg2: i32) -> (i32, i32, i32, i32) {
    %c0_i32 = arith.constant 0 : i32
    %c0_i32_0 = arith.constant 0 : i32
    return %arg1, %arg0, %c0_i32, %arg2 : i32, i32, i32, i32
  }
  func.func @transform_7(%arg0: i32, %arg1: i32, %arg2: i32) -> (i32, i32, i32, i32) {
    %c0_i32 = arith.constant 0 : i32
    %c0_i32_0 = arith.constant 0 : i32
    return %arg1, %arg0, %arg2, %c0_i32 : i32, i32, i32, i32
  }
}

module attributes {stable_mosaic.version = 11 : i64} {
  func.func @kernel(%arg0: i32, %arg1: i32, %arg2: i32, %arg3: memref<1x8x32xf32, #tpu.memory_space<vmem>>, %arg4: memref<1x32x24xbf16, #tpu.memory_space<vmem>>, %arg5: memref<1x1x24xf32, #tpu.memory_space<vmem>>, %arg6: memref<8x2xf32, #tpu.memory_space<vmem>>, %arg7: memref<8x2xf32, #tpu.memory_space<vmem>>, %arg8: memref<1x1x8x8xbf16, #tpu.memory_space<vmem>>, %arg9: memref<1x1x8x8xbf16, #tpu.memory_space<vmem>>, %arg10: memref<1x1x8x8xbf16, #tpu.memory_space<vmem>>) attributes {dimension_semantics = [#tpu.dimension_semantics<parallel>, #tpu.dimension_semantics<parallel>, #tpu.dimension_semantics<parallel>], iteration_bounds = array<i64: 4, 2, 1>, scalar_prefetch = 0 : i64, scratch_operands = 0 : i64, tpu.core_type = #tpu.core_type<tc>, window_params = [{transform_indices = @transform_0, window_bounds = array<i64: 1, 8, 32>}, {transform_indices = @transform_1, window_bounds = array<i64: 1, 32, 24>}, {transform_indices = @transform_2, window_bounds = array<i64: 1, 1, 24>}, {transform_indices = @transform_3, window_bounds = array<i64: 8, 2>}, {transform_indices = @transform_4, window_bounds = array<i64: 8, 2>}, {transform_indices = @transform_5, window_bounds = array<i64: 1, 1, 8, 8>}, {transform_indices = @transform_6, window_bounds = array<i64: 1, 1, 8, 8>}, {transform_indices = @transform_7, window_bounds = array<i64: 1, 1, 8, 8>}]} {
    %c0 = arith.constant 0 : index
    %c0_0 = arith.constant 0 : index
    %c0_1 = arith.constant 0 : index
    %0 = vector.load %arg3[%c0, %c0_0, %c0_1] : memref<1x8x32xf32, #tpu.memory_space<vmem>>, vector<1x8x32xf32>
    %1 = vector.shape_cast %0 : vector<1x8x32xf32> to vector<8x32xf32>
    %2 = arith.truncf %1 : vector<8x32xf32> to vector<8x32xbf16>
    %c0_2 = arith.constant 0 : index
    %c0_3 = arith.constant 0 : index
    %c0_4 = arith.constant 0 : index
    %3 = vector.load %arg4[%c0_2, %c0_3, %c0_4] : memref<1x32x24xbf16, #tpu.memory_space<vmem>>, vector<1x32x24xbf16>
    %4 = vector.shape_cast %3 : vector<1x32x24xbf16> to vector<32x24xbf16>
    %cst = arith.constant dense<0.000000e+00> : vector<8x24xf32>
    %5 = tpu.matmul %2, %4, %cst {dimension_numbers = #tpu.dot_dimension_numbers<[1], [0], [0], [1], [0, 0, 1, 1], [], []>} : vector<8x32xbf16>, vector<32x24xbf16>, vector<8x24xf32> -> vector<8x24xf32>
    %c0_5 = arith.constant 0 : index
    %c0_6 = arith.constant 0 : index
    %c0_7 = arith.constant 0 : index
    %6 = vector.load %arg5[%c0_5, %c0_6, %c0_7] : memref<1x1x24xf32, #tpu.memory_space<vmem>>, vector<1x1x24xf32>
    %7 = vector.shape_cast %6 : vector<1x1x24xf32> to vector<1x24xf32>
    %8 = vector.broadcast %7 : vector<1x24xf32> to vector<8x24xf32>
    %9 = arith.addf %5, %8 : vector<8x24xf32>
    %10 = vector.extract_strided_slice %9 {offsets = [0, 0], sizes = [8, 8], strides = [1, 1]} : vector<8x24xf32> to vector<8x8xf32>
    %11 = vector.extract_strided_slice %9 {offsets = [0, 8], sizes = [8, 8], strides = [1, 1]} : vector<8x24xf32> to vector<8x8xf32>
    %12 = vector.extract_strided_slice %9 {offsets = [0, 16], sizes = [8, 8], strides = [1, 1]} : vector<8x24xf32> to vector<8x8xf32>
    %c0_8 = arith.constant 0 : index
    %c0_9 = arith.constant 0 : index
    %13 = vector.load %arg6[%c0_8, %c0_9] : memref<8x2xf32, #tpu.memory_space<vmem>>, vector<8x2xf32>
    %c0_10 = arith.constant 0 : index
    %c0_11 = arith.constant 0 : index
    %14 = vector.load %arg7[%c0_10, %c0_11] : memref<8x2xf32, #tpu.memory_space<vmem>>, vector<8x2xf32>
    %15 = vector.extract_strided_slice %10 {offsets = [0, 0], sizes = [8, 2], strides = [1, 1]} : vector<8x8xf32> to vector<8x2xf32>
    %16 = vector.extract_strided_slice %10 {offsets = [0, 2], sizes = [8, 2], strides = [1, 1]} : vector<8x8xf32> to vector<8x2xf32>
    %17 = arith.mulf %15, %13 : vector<8x2xf32>
    %18 = arith.mulf %16, %14 : vector<8x2xf32>
    %19 = arith.subf %17, %18 : vector<8x2xf32>
    %20 = arith.mulf %15, %14 : vector<8x2xf32>
    %21 = arith.mulf %16, %13 : vector<8x2xf32>
    %22 = arith.addf %20, %21 : vector<8x2xf32>
    %23 = tpu.concatenate %19, %22 in 1 : vector<8x2xf32>, vector<8x2xf32> -> vector<8x4xf32>
    %24 = vector.extract_strided_slice %10 {offsets = [0, 4], sizes = [8, 4], strides = [1, 1]} : vector<8x8xf32> to vector<8x4xf32>
    %25 = tpu.concatenate %23, %24 in 1 : vector<8x4xf32>, vector<8x4xf32> -> vector<8x8xf32>
    %26 = arith.truncf %25 : vector<8x8xf32> to vector<8x8xbf16>
    %c0_12 = arith.constant 0 : index
    %c0_13 = arith.constant 0 : index
    %c0_14 = arith.constant 0 : index
    %c0_15 = arith.constant 0 : index
    %27 = vector.load %arg8[%c0_12, %c0_13, %c0_14, %c0_15] : memref<1x1x8x8xbf16, #tpu.memory_space<vmem>>, vector<1x1x8x8xbf16>
    %28 = vector.shape_cast %27 : vector<1x1x8x8xbf16> to vector<8x8xbf16>
    %29 = vector.shape_cast %26 : vector<8x8xbf16> to vector<1x1x8x8xbf16>
    tpu.vector_store %arg8[%c0_12, %c0_13, %c0_14, %c0_15], %29 {strides = array<i32>} : memref<1x1x8x8xbf16, #tpu.memory_space<vmem>>, vector<1x1x8x8xbf16>,
    %30 = vector.extract_strided_slice %11 {offsets = [0, 0], sizes = [8, 2], strides = [1, 1]} : vector<8x8xf32> to vector<8x2xf32>
    %31 = vector.extract_strided_slice %11 {offsets = [0, 2], sizes = [8, 2], strides = [1, 1]} : vector<8x8xf32> to vector<8x2xf32>
    %32 = arith.mulf %30, %13 : vector<8x2xf32>
    %33 = arith.mulf %31, %14 : vector<8x2xf32>
    %34 = arith.subf %32, %33 : vector<8x2xf32>
    %35 = arith.mulf %30, %14 : vector<8x2xf32>
    %36 = arith.mulf %31, %13 : vector<8x2xf32>
    %37 = arith.addf %35, %36 : vector<8x2xf32>
    %38 = tpu.concatenate %34, %37 in 1 : vector<8x2xf32>, vector<8x2xf32> -> vector<8x4xf32>
    %39 = vector.extract_strided_slice %11 {offsets = [0, 4], sizes = [8, 4], strides = [1, 1]} : vector<8x8xf32> to vector<8x4xf32>
    %40 = tpu.concatenate %38, %39 in 1 : vector<8x4xf32>, vector<8x4xf32> -> vector<8x8xf32>
    %41 = tpu.transpose %40, [1, 0] : vector<8x8xf32> -> vector<8x8xf32>
    %42 = arith.truncf %41 : vector<8x8xf32> to vector<8x8xbf16>
    %c0_16 = arith.constant 0 : index
    %c0_17 = arith.constant 0 : index
    %c0_18 = arith.constant 0 : index
    %c0_19 = arith.constant 0 : index
    %43 = vector.load %arg9[%c0_16, %c0_17, %c0_18, %c0_19] : memref<1x1x8x8xbf16, #tpu.memory_space<vmem>>, vector<1x1x8x8xbf16>
    %44 = vector.shape_cast %43 : vector<1x1x8x8xbf16> to vector<8x8xbf16>
    %45 = vector.shape_cast %42 : vector<8x8xbf16> to vector<1x1x8x8xbf16>
    tpu.vector_store %arg9[%c0_16, %c0_17, %c0_18, %c0_19], %45 {strides = array<i32>} : memref<1x1x8x8xbf16, #tpu.memory_space<vmem>>, vector<1x1x8x8xbf16>,
    %46 = arith.truncf %12 : vector<8x8xf32> to vector<8x8xbf16>
    %c0_20 = arith.constant 0 : index
    %c0_21 = arith.constant 0 : index
    %c0_22 = arith.constant 0 : index
    %c0_23 = arith.constant 0 : index
    %47 = vector.load %arg10[%c0_20, %c0_21, %c0_22, %c0_23] : memref<1x1x8x8xbf16, #tpu.memory_space<vmem>>, vector<1x1x8x8xbf16>
    %48 = vector.shape_cast %47 : vector<1x1x8x8xbf16> to vector<8x8xbf16>
    %49 = vector.shape_cast %46 : vector<8x8xbf16> to vector<1x1x8x8xbf16>
    tpu.vector_store %arg10[%c0_20, %c0_21, %c0_22, %c0_23], %49 {strides = array<i32>} : memref<1x1x8x8xbf16, #tpu.memory_space<vmem>>, vector<1x1x8x8xbf16>,
    return
  }
  func.func @transform_0(%arg0: i32, %arg1: i32, %arg2: i32) -> (i32, i32, i32) {
    %c0_i32 = arith.constant 0 : i32
    %c0_i32_0 = arith.constant 0 : i32
    return %arg1, %arg2, %c0_i32 : i32, i32, i32
  }
  func.func @transform_1(%arg0: i32, %arg1: i32, %arg2: i32) -> (i32, i32, i32) {
    %c0_i32 = arith.constant 0 : i32
    %c0_i32_0 = arith.constant 0 : i32
    %c0_i32_1 = arith.constant 0 : i32
    return %arg0, %c0_i32, %c0_i32_0 : i32, i32, i32
  }
  func.func @transform_2(%arg0: i32, %arg1: i32, %arg2: i32) -> (i32, i32, i32) {
    %c0_i32 = arith.constant 0 : i32
    %c0_i32_0 = arith.constant 0 : i32
    %c0_i32_1 = arith.constant 0 : i32
    return %arg0, %c0_i32, %c0_i32_0 : i32, i32, i32
  }
  func.func @transform_3(%arg0: i32, %arg1: i32, %arg2: i32) -> (i32, i32) {
    %c0_i32 = arith.constant 0 : i32
    %c0_i32_0 = arith.constant 0 : i32
    return %arg2, %c0_i32 : i32, i32
  }
  func.func @transform_4(%arg0: i32, %arg1: i32, %arg2: i32) -> (i32, i32) {
    %c0_i32 = arith.constant 0 : i32
    %c0_i32_0 = arith.constant 0 : i32
    return %arg2, %c0_i32 : i32, i32
  }
  func.func @transform_5(%arg0: i32, %arg1: i32, %arg2: i32) -> (i32, i32, i32, i32) {
    %c0_i32 = arith.constant 0 : i32
    %c0_i32_0 = arith.constant 0 : i32
    return %arg1, %arg0, %arg2, %c0_i32 : i32, i32, i32, i32
  }
  func.func @transform_6(%arg0: i32, %arg1: i32, %arg2: i32) -> (i32, i32, i32, i32) {
    %c0_i32 = arith.constant 0 : i32
    %c0_i32_0 = arith.constant 0 : i32
    return %arg1, %arg0, %c0_i32, %arg2 : i32, i32, i32, i32
  }
  func.func @transform_7(%arg0: i32, %arg1: i32, %arg2: i32) -> (i32, i32, i32, i32) {
    %c0_i32 = arith.constant 0 : i32
    %c0_i32_0 = arith.constant 0 : i32
    return %arg1, %arg0, %arg2, %c0_i32 : i32, i32, i32, i32
  }
}

</mosaic_0001>

<llo_original>
// kernel: tpu_custom_call.1
$region0: #{tpu_custom_call.1}
  #allocation0 [shape = 'u32[]', space=smem, size = 0x4, offset = 0x4, fixed_abs, tag = 'smem constant byte address 0x4 - core index']
  #allocation1 [shape = 'u32[144,128]{1,0:T(1,128)}', space=vmem, size = 0x12000, scoped, tag = 'internal scratch']
  %s0 = inlined_call_operand.vmem [shape: f32[2,8,32], index: 0, kind: input, shape index: {}]
  %s1 = inlined_call_operand.vmem [shape: bf16[4,32,24], index: 1, kind: input, shape index: {}]
  %s2 = inlined_call_operand.vmem [shape: f32[4,1,24], index: 2, kind: input, shape index: {}]
  %s3 = inlined_call_operand.vmem [shape: f32[8,2], index: 3, kind: input, shape index: {}]
  %s4 = inlined_call_operand.vmem [shape: f32[8,2], index: 4, kind: input, shape index: {}]
  %s5 = inlined_call_operand.hbm [shape: bf16[2,4,8,8], index: 5, kind: output, shape index: {0}]
  %s6 = inlined_call_operand.hbm [shape: bf16[2,4,8,8], index: 6, kind: output, shape index: {1}]
  %s7 = inlined_call_operand.hbm [shape: bf16[2,4,8,8], index: 7, kind: output, shape index: {2}]
  %8 = xla_tuple %s5, %s6, %s7
  %s9 = sld [smem:[#allocation0]]
  $region69: #{tpu_custom_call.1} parent=0
    _
  %s11 = ssub.s32 1, %s9
  %s12 = scalar_select 0, %s11, %s9
  $region1: #{tpu_custom_call.1} parent=0
    #allocation2 [shape = 'u8[4096]{0}', space=vmem, size = 0x1000, scoped, tag = 'output window, operand 0']
    #allocation3 [shape = 's32[2]{0}', space=sflag, size = 0x8, scoped, tag = 'scoped memory for tpu_custom_call.1']
    #allocation4 [shape = 'u8[4096]{0}', space=vmem, size = 0x1000, scoped, tag = 'output window, operand 1']
    #allocation5 [shape = 's32[2]{0}', space=sflag, size = 0x8, scoped, tag = 'scoped memory for tpu_custom_call.1']
    #allocation6 [shape = 'u8[4096]{0}', space=vmem, size = 0x1000, scoped, tag = 'output window, operand 2']
    %13 = vsyncpa [#allocation3], 0
    %s14 = scalar_lea.sflag [#allocation3], 1
    %15 = vsyncpa %s14, 0
    %16 = vsyncpa [#allocation5], 0
    %s17 = scalar_lea.sflag [#allocation5], 1
    %18 = vsyncpa %s17, 0
    loop: start=0, step=1, limit=10
    $region2: #{tpu_custom_call.1} parent=1 // loop_pre_header
      _
    $region3: #{tpu_custom_call.1} parent=1 // loop_header
      %s20 = sphi 0, %s24
      %p21 = scmp.ge.s32.totalorder %s20, 10
      %s27 = sphi 0, %s46
      %s28 = sphi 0, %s42
      %s29 = sphi 0, %s38
      %s30 = sphi 0, %s27
      %s31 = sphi 0, %s28
      %s32 = sphi 0, %s29
      %s33 = sphi 0, %s30
      %s34 = sphi 0, %s31
      %s35 = sphi 0, %s32
      %s51 = sphi 0, %s53
      %s54 = sphi 0, %s51
      %s55 = sphi 0, %s54
      %s71 = sphi 0, %s55
      %s77 = sphi 0, %s79
      %s80 = sphi 0, %s77
      %s81 = sphi 0, %s80
      %s97 = sphi 0, %s81
      %s103 = sphi 0, %s105
      %s106 = sphi 0, %s103
      %s107 = sphi 0, %s106
      %s123 = sphi 0, %s107
      %s129 = sphi 0, %s131
      %s132 = sphi 0, %s129
      %s133 = sphi 0, %s132
      %s149 = sphi 0, %s133
      %s155 = sphi 0, %s157
      %s158 = sphi 0, %s155
      %s159 = sphi 0, %s158
      %s175 = sphi 0, %s159
      %s185 = sphi 0, %s187
      %s188 = sphi 0, %s185
      %s189 = sphi 0, %s188
      %s205 = sphi 0, %s189
      %s215 = sphi 0, %s217
      %s218 = sphi 0, %s215
      %s219 = sphi 0, %s218
      %s235 = sphi 0, %s219
      %s245 = sphi 0, %s247
      %s248 = sphi 0, %s245
      %s249 = sphi 0, %s248
      %s265 = sphi 0, %s249
    $region4: #{tpu_custom_call.1} parent=1 // loop_header_branch
      %23 = sbr.rel (%p21) target = $region8
    $region5: #{tpu_custom_call.1} parent=1 // loop_body
      %s25 = ssub.s32 %s20, 1
      %s26 = ssub.s32 %s20, 2
      %s36 = sadd.s32 1, %s29
      %p37 = scmp.ge.s32.totalorder %s36, 1
      %s38 = scalar_select %p37, 0, %s36
      %s39 = sadd.s32 1, %s28
      %s40 = scalar_select %p37, %s39, %s28
      %p41 = scmp.ge.s32.totalorder %s40, 2
      %s42 = scalar_select %p41, 0, %s40
      %s43 = sadd.s32 1, %s27
      %s44 = scalar_select %p41, %s43, %s27
      %p45 = scmp.ge.s32.totalorder %s44, 4
      %s46 = scalar_select %p45, 0, %s44
      %s47 = ssub.s32 %s28, %s42
      %s48 = ssub.s32 %s29, %s38
      %s49 = sor.u32 %s47, %s48
      %p50 = scmp.eq.s32.totalorder %s49, 0
      %s52 = sadd.s32 %s51, 1
      %s53 = scalar_select %p50, %s51, %s52
      %p56 = pneg %p50
      %p57 = scmp.eq.s32.totalorder %s20, 7
      %p58 = por %p56, %p57
      %p59 = scmp.ne.s32.totalorder %s51, %s54
      %p60 = scmp.eq.s32.totalorder %s20, 0
      %p61 = por %p59, %p60
      %p62 = scmp.ne.s32.totalorder %s51, %s54
      %p63 = scmp.eq.s32.totalorder %s25, 7
      %p64 = por %p62, %p63
      %p65 = scmp.ne.s32.totalorder %s54, %s55
      %p66 = scmp.eq.s32.totalorder %s25, 0
      %p67 = por %p65, %p66
      %p68 = scmp.ne.s32.totalorder %s54, %s55
      %p69 = scmp.eq.s32.totalorder %s26, 7
      %p70 = por %p68, %p69
      %p72 = scmp.ne.s32.totalorder %s55, %s71
      %p73 = scmp.eq.s32.totalorder %s26, 0
      %p74 = por %p72, %p73
      %s75 = ssub.s32 %s27, %s46
      %p76 = scmp.eq.s32.totalorder %s75, 0
      %s78 = sadd.s32 %s77, 1
      %s79 = scalar_select %p76, %s77, %s78
      %p82 = pneg %p76
      %p83 = scmp.eq.s32.totalorder %s20, 7
      %p84 = por %p82, %p83
      %p85 = scmp.ne.s32.totalorder %s77, %s80
      %p86 = scmp.eq.s32.totalorder %s20, 0
      %p87 = por %p85, %p86
      %p88 = scmp.ne.s32.totalorder %s77, %s80
      %p89 = scmp.eq.s32.totalorder %s25, 7
      %p90 = por %p88, %p89
      %p91 = scmp.ne.s32.totalorder %s80, %s81
      %p92 = scmp.eq.s32.totalorder %s25, 0
      %p93 = por %p91, %p92
      %p94 = scmp.ne.s32.totalorder %s80, %s81
      %p95 = scmp.eq.s32.totalorder %s26, 7
      %p96 = por %p94, %p95
      %p98 = scmp.ne.s32.totalorder %s81, %s97
      %p99 = scmp.eq.s32.totalorder %s26, 0
      %p100 = por %p98, %p99
      %s101 = ssub.s32 %s27, %s46
      %p102 = scmp.eq.s32.totalorder %s101, 0
      %s104 = sadd.s32 %s103, 1
      %s105 = scalar_select %p102, %s103, %s104
      %p108 = pneg %p102
      %p109 = scmp.eq.s32.totalorder %s20, 7
      %p110 = por %p108, %p109
      %p111 = scmp.ne.s32.totalorder %s103, %s106
      %p112 = scmp.eq.s32.totalorder %s20, 0
      %p113 = por %p111, %p112
      %p114 = scmp.ne.s32.totalorder %s103, %s106
      %p115 = scmp.eq.s32.totalorder %s25, 7
      %p116 = por %p114, %p115
      %p117 = scmp.ne.s32.totalorder %s106, %s107
      %p118 = scmp.eq.s32.totalorder %s25, 0
      %p119 = por %p117, %p118
      %p120 = scmp.ne.s32.totalorder %s106, %s107
      %p121 = scmp.eq.s32.totalorder %s26, 7
      %p122 = por %p120, %p121
      %p124 = scmp.ne.s32.totalorder %s107, %s123
      %p125 = scmp.eq.s32.totalorder %s26, 0
      %p126 = por %p124, %p125
      %s127 = ssub.s32 %s29, %s38
      %p128 = scmp.eq.s32.totalorder %s127, 0
      %s130 = sadd.s32 %s129, 1
      %s131 = scalar_select %p128, %s129, %s130
      %p134 = pneg %p128
      %p135 = scmp.eq.s32.totalorder %s20, 7
      %p136 = por %p134, %p135
      %p137 = scmp.ne.s32.totalorder %s129, %s132
      %p138 = scmp.eq.s32.totalorder %s20, 0
      %p139 = por %p137, %p138
      %p140 = scmp.ne.s32.totalorder %s129, %s132
      %p141 = scmp.eq.s32.totalorder %s25, 7
      %p142 = por %p140, %p141
      %p143 = scmp.ne.s32.totalorder %s132, %s133
      %p144 = scmp.eq.s32.totalorder %s25, 0
      %p145 = por %p143, %p144
      %p146 = scmp.ne.s32.totalorder %s132, %s133
      %p147 = scmp.eq.s32.totalorder %s26, 7
      %p148 = por %p146, %p147
      %p150 = scmp.ne.s32.totalorder %s133, %s149
      %p151 = scmp.eq.s32.totalorder %s26, 0
      %p152 = por %p150, %p151
      %s153 = ssub.s32 %s29, %s38
      %p154 = scmp.eq.s32.totalorder %s153, 0
      %s156 = sadd.s32 %s155, 1
      %s157 = scalar_select %p154, %s155, %s156
      %p160 = pneg %p154
      %p161 = scmp.eq.s32.totalorder %s20, 7
      %p162 = por %p160, %p161
      %p163 = scmp.ne.s32.totalorder %s155, %s158
      %p164 = scmp.eq.s32.totalorder %s20, 0
      %p165 = por %p163, %p164
      %p166 = scmp.ne.s32.totalorder %s155, %s158
      %p167 = scmp.eq.s32.totalorder %s25, 7
      %p168 = por %p166, %p167
      %p169 = scmp.ne.s32.totalorder %s158, %s159
      %p170 = scmp.eq.s32.totalorder %s25, 0
      %p171 = por %p169, %p170
      %p172 = scmp.ne.s32.totalorder %s158, %s159
      %p173 = scmp.eq.s32.totalorder %s26, 7
      %p174 = por %p172, %p173
      %p176 = scmp.ne.s32.totalorder %s159, %s175
      %p177 = scmp.eq.s32.totalorder %s26, 0
      %p178 = por %p176, %p177
      %s179 = ssub.s32 %s28, %s42
      %s180 = ssub.s32 %s27, %s46
      %s181 = sor.u32 %s179, %s180
      %s182 = ssub.s32 %s29, %s38
      %s183 = sor.u32 %s181, %s182
      %p184 = scmp.eq.s32.totalorder %s183, 0
      %s186 = sadd.s32 %s185, 1
      %s187 = scalar_select %p184, %s185, %s186
      %p190 = pneg %p184
      %p191 = scmp.eq.s32.totalorder %s20, 7
      %p192 = por %p190, %p191
      %p193 = scmp.ne.s32.totalorder %s185, %s188
      %p194 = scmp.eq.s32.totalorder %s20, 0
      %p195 = por %p193, %p194
      %p196 = scmp.ne.s32.totalorder %s185, %s188
      %p197 = scmp.eq.s32.totalorder %s25, 7
      %p198 = por %p196, %p197
      %p199 = scmp.ne.s32.totalorder %s188, %s189
      %p200 = scmp.eq.s32.totalorder %s25, 0
      %p201 = por %p199, %p200
      %p202 = scmp.ne.s32.totalorder %s188, %s189
      %p203 = scmp.eq.s32.totalorder %s26, 7
      %p204 = por %p202, %p203
      %p206 = scmp.ne.s32.totalorder %s189, %s205
      %p207 = scmp.eq.s32.totalorder %s26, 0
      %p208 = por %p206, %p207
      %s209 = ssub.s32 %s28, %s42
      %s210 = ssub.s32 %s27, %s46
      %s211 = sor.u32 %s209, %s210
      %s212 = ssub.s32 %s29, %s38
      %s213 = sor.u32 %s211, %s212
      %p214 = scmp.eq.s32.totalorder %s213, 0
      %s216 = sadd.s32 %s215, 1
      %s217 = scalar_select %p214, %s215, %s216
      %p220 = pneg %p214
      %p221 = scmp.eq.s32.totalorder %s20, 7
      %p222 = por %p220, %p221
      %p223 = scmp.ne.s32.totalorder %s215, %s218
      %p224 = scmp.eq.s32.totalorder %s20, 0
      %p225 = por %p223, %p224
      %p226 = scmp.ne.s32.totalorder %s215, %s218
      %p227 = scmp.eq.s32.totalorder %s25, 7
      %p228 = por %p226, %p227
      %p229 = scmp.ne.s32.totalorder %s218, %s219
      %p230 = scmp.eq.s32.totalorder %s25, 0
      %p231 = por %p229, %p230
      %p232 = scmp.ne.s32.totalorder %s218, %s219
      %p233 = scmp.eq.s32.totalorder %s26, 7
      %p234 = por %p232, %p233
      %p236 = scmp.ne.s32.totalorder %s219, %s235
      %p237 = scmp.eq.s32.totalorder %s26, 0
      %p238 = por %p236, %p237
      %s239 = ssub.s32 %s28, %s42
      %s240 = ssub.s32 %s27, %s46
      %s241 = sor.u32 %s239, %s240
      %s242 = ssub.s32 %s29, %s38
      %s243 = sor.u32 %s241, %s242
      %p244 = scmp.eq.s32.totalorder %s243, 0
      %s246 = sadd.s32 %s245, 1
      %s247 = scalar_select %p244, %s245, %s246
      %p250 = pneg %p244
      %p251 = scmp.eq.s32.totalorder %s20, 7
      %p252 = por %p250, %p251
      %p253 = scmp.ne.s32.totalorder %s245, %s248
      %p254 = scmp.eq.s32.totalorder %s20, 0
      %p255 = por %p253, %p254
      %p256 = scmp.ne.s32.totalorder %s245, %s248
      %p257 = scmp.eq.s32.totalorder %s25, 7
      %p258 = por %p256, %p257
      %p259 = scmp.ne.s32.totalorder %s248, %s249
      %p260 = scmp.eq.s32.totalorder %s25, 0
      %p261 = por %p259, %p260
      %p262 = scmp.ne.s32.totalorder %s248, %s249
      %p263 = scmp.eq.s32.totalorder %s26, 7
      %p264 = por %p262, %p263
      %p266 = scmp.ne.s32.totalorder %s249, %s265
      %p267 = scmp.eq.s32.totalorder %s26, 0
      %p268 = por %p266, %p267
      %p269 = scmp.le.s32.totalorder 1, %s20
      %p270 = scmp.lt.s32.totalorder %s20, 9
      %p271 = pnand %p269, %p270
      %p272 = pneg %p271
      // Predicated region
      $region9: #{tpu_custom_call.1} parent=5 // pred_check
        _
      $region10: #{tpu_custom_call.1} parent=5 // pred_check_branch
        %274 = sbr.rel (%p271) target = $region12
      $region11: #{tpu_custom_call.1} parent=5 // pred_region
        %s275 = ssub.s32 %s20, 1
        // Predicated region
        $region13: #{tpu_custom_call.1} parent=11 // pred_check
          %p276 = pneg %p93
        $region14: #{tpu_custom_call.1} parent=11 // pred_check_branch
          %278 = sbr.rel (%p276) target = $region16
        $region15: #{tpu_custom_call.1} parent=11 // pred_region
          %p279 = scmp.lt.s32.totalorder %s30, 3
          %s280 = scalar_select %p279, %s30, 3
          %s281 = smul.addr %s280, 4
          %s282 = smul.addr %s281, 4
          %s283 = scalar_lea.vmem %s1, %s282
        $region16: #{tpu_custom_call.1} parent=11 // pred_fallthru
          _
        // Predicated region
        $region17: #{tpu_custom_call.1} parent=11 // pred_check
          %p284 = pneg %p119
        $region18: #{tpu_custom_call.1} parent=11 // pred_check_branch
          %286 = sbr.rel (%p284) target = $region20
        $region19: #{tpu_custom_call.1} parent=11 // pred_region
          %p287 = scmp.lt.s32.totalorder %s30, 3
          %s288 = scalar_select %p287, %s30, 3
          %s289 = scalar_lea.vmem %s2, %s288
        $region20: #{tpu_custom_call.1} parent=11 // pred_fallthru
          _
        // Predicated region
        $region21: #{tpu_custom_call.1} parent=11 // pred_check
          %p290 = pneg %p145
        $region22: #{tpu_custom_call.1} parent=11 // pred_check_branch
          %292 = sbr.rel (%p290) target = $region24
        $region23: #{tpu_custom_call.1} parent=11 // pred_region
          %p293 = scmp.lt.s32.totalorder %s32, 0
          %s294 = scalar_select %p293, %s32, 0
          %s295 = smul.addr %s294, 8
          %s296 = scalar_lea.vmem %s3, %s295
        $region24: #{tpu_custom_call.1} parent=11 // pred_fallthru
          _
        // Predicated region
        $region25: #{tpu_custom_call.1} parent=11 // pred_check
          %p297 = pneg %p171
        $region26: #{tpu_custom_call.1} parent=11 // pred_check_branch
          %299 = sbr.rel (%p297) target = $region28
        $region27: #{tpu_custom_call.1} parent=11 // pred_region
          %p300 = scmp.lt.s32.totalorder %s32, 0
          %s301 = scalar_select %p300, %s32, 0
          %s302 = smul.addr %s301, 8
          %s303 = scalar_lea.vmem %s4, %s302
        $region28: #{tpu_custom_call.1} parent=11 // pred_fallthru
          _
      $region12: #{tpu_custom_call.1} parent=5 // pred_fallthru
        _
      %p304 = scmp.lt.s32.totalorder %s20, 8
      // Predicated region
      $region29: #{tpu_custom_call.1} parent=5 // pred_check
        %p305 = pneg %p304
      $region30: #{tpu_custom_call.1} parent=5 // pred_check_branch
        %307 = sbr.rel (%p305) target = $region32
      $region31: #{tpu_custom_call.1} parent=5 // pred_region
        // Predicated region
        $region33: #{tpu_custom_call.1} parent=31 // pred_check
          %p308 = pneg %p61
        $region34: #{tpu_custom_call.1} parent=31 // pred_check_branch
          %310 = sbr.rel (%p308) target = $region36
        $region35: #{tpu_custom_call.1} parent=31 // pred_region
          %p311 = scmp.lt.s32.totalorder %s28, 1
          %s312 = scalar_select %p311, %s28, 1
          %p313 = scmp.lt.s32.totalorder %s29, 0
          %s314 = scalar_select %p313, %s29, 0
          %s315 = sadd.s32 %s314, %s312
          %s316 = smul.addr %s315, 8
          %s317 = scalar_lea.vmem %s0, %s316
        $region36: #{tpu_custom_call.1} parent=31 // pred_fallthru
          _
      $region32: #{tpu_custom_call.1} parent=5 // pred_fallthru
        _
      %p318 = scmp.le.s32.totalorder 1, %s20
      %p319 = scmp.lt.s32.totalorder %s20, 9
      %p320 = pnand %p318, %p319
      %p321 = pneg %p320
      // Predicated region
      $region37: #{tpu_custom_call.1} parent=5 // pred_check
        _
      $region38: #{tpu_custom_call.1} parent=5 // pred_check_branch
        %323 = sbr.rel (%p320) target = $region40
      $region39: #{tpu_custom_call.1} parent=5 // pred_region
        %s324 = ssub.s32 %s20, 1
        %p325 = scmp.lt.s32.totalorder %s31, 1
        %s326 = scalar_select %p325, %s31, 1
        %p327 = scmp.lt.s32.totalorder %s32, 0
        %s328 = scalar_select %p327, %s32, 0
        %s329 = sadd.s32 %s328, %s326
        %s330 = smul.addr %s329, 8
        %s331 = scalar_lea.vmem %s0, %s330
        %p332 = pneg %p67
        %p333 = pneg %p64
        %p334 = scmp.lt.s32.totalorder %s30, 3
        %s335 = scalar_select %p334, %s30, 3
        %s336 = smul.addr %s335, 4
        %s337 = smul.addr %s336, 4
        %s338 = scalar_lea.vmem %s1, %s337
        %p339 = pneg %p93
        %p340 = pneg %p90
        %p341 = scmp.lt.s32.totalorder %s30, 3
        %s342 = scalar_select %p341, %s30, 3
        %s343 = scalar_lea.vmem %s2, %s342
        %p344 = pneg %p119
        %p345 = pneg %p116
        %p346 = scmp.lt.s32.totalorder %s32, 0
        %s347 = scalar_select %p346, %s32, 0
        %s348 = smul.addr %s347, 8
        %s349 = scalar_lea.vmem %s3, %s348
        %p350 = pneg %p145
        %p351 = pneg %p142
        %p352 = scmp.lt.s32.totalorder %s32, 0
        %s353 = scalar_select %p352, %s32, 0
        %s354 = smul.addr %s353, 8
        %s355 = scalar_lea.vmem %s4, %s354
        %p356 = pneg %p171
        %p357 = pneg %p168
        %p358 = pneg %p201
        %p359 = pneg %p198
        %s360 = sand.u32 %s188, 1
        %s361 = scalar_lea.sflag [#allocation3], %s360
        %s362 = sand.u32 %s188, 1
        %s363 = smul.addr %s362, 4
        %s364 = scalar_lea.vmem [#allocation2], %s363
        %p365 = pneg %p231
        %p366 = pneg %p228
        %s367 = sand.u32 %s25, 1
        %s368 = scalar_lea.sflag [#allocation5], %s367
        %s369 = sand.u32 %s218, 1
        %s370 = smul.addr %s369, 4
        %s371 = scalar_lea.vmem [#allocation4], %s370
        %p372 = pneg %p261
        %p373 = pneg %p258
        %s374 = sand.u32 %s25, 1
        %s375 = scalar_lea.sflag [#allocation5], %s374
        %s376 = sand.u32 %s248, 1
        %s377 = smul.addr %s376, 4
        %s378 = scalar_lea.vmem [#allocation6], %s377
        %p379 = scmp.lt.s32.totalorder %s31, 1
        %s380 = scalar_select %p379, %s31, 1
        %p381 = scmp.lt.s32.totalorder %s32, 0
        %s382 = scalar_select %p381, %s32, 0
        %s383 = sadd.s32 %s382, %s380
        %s384 = smul.addr %s383, 8
        %s385 = scalar_lea.vmem %s0, %s384
        %p386 = scmp.lt.s32.totalorder %s30, 3
        %s387 = scalar_select %p386, %s30, 3
        %s388 = smul.addr %s387, 4
        %s389 = smul.addr %s388, 4
        %s390 = scalar_lea.vmem %s1, %s389
        %p391 = scmp.lt.s32.totalorder %s30, 3
        %s392 = scalar_select %p391, %s30, 3
        %s393 = scalar_lea.vmem %s2, %s392
        %p394 = scmp.lt.s32.totalorder %s32, 0
        %s395 = scalar_select %p394, %s32, 0
        %s396 = smul.addr %s395, 8
        %s397 = scalar_lea.vmem %s3, %s396
        %p398 = scmp.lt.s32.totalorder %s32, 0
        %s399 = scalar_select %p398, %s32, 0
        %s400 = smul.addr %s399, 8
        %s401 = scalar_lea.vmem %s4, %s400
        %v403 = vld [vmem:[%s385] sm:$0xff]
        %v404 = vpack.c.bf16 %v403, %v403
        %v405 = vld [vmem:[%s390] sm:$0xf]
        %v406 = vld [vmem:[%s390 + $0x4] sm:$0xf]
        %v407 = vld [vmem:[%s390 + $0x8] sm:$0xf]
        %v408 = vld [vmem:[%s390 + $0xc] sm:$0xf]
        %v409 = vld [vmem:[%s393] sm:$0x1]
        %v411 = vlaneseq
        %v412 = vshrl.u32 %v411, 7
        %v413 = vsub.s32 0, %v412
        %v414 = vrot.slane %v409, %v413
        %v420 = vunpack.c.l.b16 %v405
        %v421 = vunpack.c.l.b16 %v406
        %v422 = vunpack.c.l.b16 %v407
        %v423 = vunpack.c.l.b16 %v408
        %v424 = vpack.c.b16 %v421, %v420
        %v425 = vpack.c.b16 %v423, %v422
        %vm428 = vcmask 261120
        %v430 = vsel %vm428, %v404, 0
        %432 = vmatprep.subr.bf16.mxu0 0
        %433 = vmatpush1.bf16.msra.mxu0 %v424
        %434 = vmatprep.subr.bf16.mxu0 0
        %435 = vmatpush1.bf16.msra.mxu0 %v425
        %436 = vmatprep.subr.bf16.mxu0 0
        %437 = vmatpush1.bf16.msra.mxu0 0
        %438 = vmatprep.subr.bf16.mxu0 0
        %439 = vmatpush1.bf16.msra.mxu0 0
        %440 = vmatprep.subr.bf16.mxu0 0
        %441 = vmatpush1.bf16.msra.mxu0 0
        %442 = vmatprep.subr.bf16.mxu0 0
        %443 = vmatpush1.bf16.msra.mxu0 0
        %444 = vmatprep.subr.bf16.mxu0 0
        %445 = vmatpush1.bf16.msra.mxu0 0
        %446 = vmatprep.subr.bf16.mxu0 0
        %447 = vmatpush1.bf16.msra.mxu0 0
        %448 = vmatprep.subr.bf16.mxu0 0
        %449 = vmatpush1.bf16.msra.mxu0 0
        %450 = vmatprep.subr.bf16.mxu0 0
        %451 = vmatpush1.bf16.msra.mxu0 0
        %452 = vmatprep.subr.bf16.mxu0 0
        %453 = vmatpush1.bf16.msra.mxu0 0
        %454 = vmatprep.subr.bf16.mxu0 0
        %455 = vmatpush1.bf16.msra.mxu0 0
        %456 = vmatprep.subr.bf16.mxu0 0
        %457 = vmatpush1.bf16.msra.mxu0 0
        %458 = vmatprep.subr.bf16.mxu0 0
        %459 = vmatpush1.bf16.msra.mxu0 0
        %460 = vmatprep.subr.bf16.mxu0 0
        %461 = vmatpush1.bf16.msra.mxu0 0
        %462 = vmatprep.subr.bf16.mxu0 0
        %463 = vmatpush1.bf16.msra.mxu0 0
        %464 = vmatprep.mubr.bf16.mxu0 0
        %465 = vmatmul.mubr.bf16.gmra.mrb[0].mxu0 %v430
        %v466 = vpop.f32.mrb[0].mxu0
        %v467 = vadd.f32 %v414, %v466
        %v468 = vpop.f32.mrb[0].mxu0
        %v469 = vpop.f32.mrb[0].mxu0
        %v470 = vpop.f32.mrb[0].mxu0
        %471 = vdwg.mxu0
        %v472 = vld [vmem:[%s397] sm:$0xff]
        %v473 = vld [vmem:[%s401] sm:$0xff]
        %v474 = vmul.f32 %v467, %v472
        %476 = vrot.lane.b32.xlu0 %v473, 2
        %v477 = vpop.permute.xlu0 %476
        %v479 = vmul.f32 %v467, %v477
        %481 = vrot.lane.b32.xlu0 %v479, 126
        %v482 = vpop.permute.xlu0 %481
        %v484 = vsub.f32 %v474, %v482
        %v485 = vmul.f32 %v467, %v473
        %487 = vrot.lane.b32.xlu0 %v472, 2
        %v488 = vpop.permute.xlu0 %487
        %v490 = vmul.f32 %v467, %v488
        %492 = vrot.lane.b32.xlu0 %v490, 126
        %v493 = vpop.permute.xlu0 %492
        %v495 = vadd.f32 %v485, %v493
        %497 = vrot.lane.b32.xlu0 %v495, 2
        %v498 = vpop.permute.xlu0 %497
        %vm500 = vcmask 15360
        %v501 = vsel %vm500, %v484, %v498
        %vm502 = vcmask 31744
        %v503 = vsel %vm502, %v501, %v467
        %v504 = vpack.c.bf16 %v503, %v503
        %vm505 = vcmask 60416
        %506 = vst.msk [vmem:[%s364] sm:$0xf] %vm505, %v504
        %507 = vrot.lane.b32.xlu0 %v472, 8
        %v508 = vpop.permute.xlu0 %507
        %v510 = vmul.f32 %v467, %v508
        %511 = vrot.lane.b32.xlu0 %v473, 10
        %v512 = vpop.permute.xlu0 %511
        %v514 = vmul.f32 %v467, %v512
        %516 = vrot.lane.b32.xlu0 %v514, 126
        %v517 = vpop.permute.xlu0 %516
        %v519 = vsub.f32 %v510, %v517
        %520 = vrot.lane.b32.xlu0 %v473, 8
        %v521 = vpop.permute.xlu0 %520
        %v523 = vmul.f32 %v467, %v521
        %524 = vrot.lane.b32.xlu0 %v472, 10
        %v525 = vpop.permute.xlu0 %524
        %v527 = vmul.f32 %v467, %v525
        %529 = vrot.lane.b32.xlu0 %v527, 126
        %v530 = vpop.permute.xlu0 %529
        %v532 = vadd.f32 %v523, %v530
        %534 = vrot.lane.b32.xlu0 %v519, 120
        %v535 = vpop.permute.xlu0 %534
        %538 = vrot.lane.b32.xlu0 %v532, 122
        %v539 = vpop.permute.xlu0 %538
        %v541 = vsel %vm500, %v535, %v539
        %543 = vrot.lane.b32.xlu0 %v467, 120
        %v544 = vpop.permute.xlu0 %543
        %v546 = vsel %vm502, %v541, %v544
        %547 = vxpose.xlu0.b32.start [1/16] %v546, 128
        %548 = vxpose.xlu0.b32.cont [2/16] 0.0, 128
        %549 = vxpose.xlu0.b32.cont [3/16] 0.0, 128
        %550 = vxpose.xlu0.b32.cont [4/16] 0.0, 128
        %551 = vxpose.xlu0.b32.cont [5/16] 0.0, 128
        %552 = vxpose.xlu0.b32.cont [6/16] 0.0, 128
        %553 = vxpose.xlu0.b32.cont [7/16] 0.0, 128
        %554 = vxpose.xlu0.b32.cont [8/16] 0.0, 128
        %555 = vxpose.xlu0.b32.cont [9/16] 0.0, 128
        %556 = vxpose.xlu0.b32.cont [10/16] 0.0, 128
        %557 = vxpose.xlu0.b32.cont [11/16] 0.0, 128
        %558 = vxpose.xlu0.b32.cont [12/16] 0.0, 128
        %559 = vxpose.xlu0.b32.cont [13/16] 0.0, 128
        %560 = vxpose.xlu0.b32.cont [14/16] 0.0, 128
        %561 = vxpose.xlu0.b32.cont [15/16] 0.0, 128
        %562 = vxpose.xlu0.b32.end [16/16] 0.0, 128
        %v563 = vpop.trf.xlu0
        %v564 = vpop.trf.xlu0
        %v565 = vpop.trf.xlu0
        %v566 = vpop.trf.xlu0
        %v567 = vpop.trf.xlu0
        %v568 = vpop.trf.xlu0
        %v569 = vpop.trf.xlu0
        %v570 = vpop.trf.xlu0
        %v571 = vpop.trf.xlu0
        %v572 = vpop.trf.xlu0
        %v573 = vpop.trf.xlu0
        %v574 = vpop.trf.xlu0
        %v575 = vpop.trf.xlu0
        %v576 = vpop.trf.xlu0
        %v577 = vpop.trf.xlu0
        %v578 = vpop.trf.xlu0
        %v579 = vpack.c.bf16 %v563, %v563
        %580 = vst.msk [vmem:[%s371] sm:$0xf] %vm505, %v579
        %v581 = vpack.c.bf16 %v467, %v467
        %v583 = vunpack.c.l.b16 %v581
        %v584 = vpack.c.b16 %v583, %v583
        %585 = vrot.lane.b32.xlu0 %v584, 112
        %v586 = vpop.permute.xlu0 %585
        %588 = vst.msk [vmem:[%s378] sm:$0xf] %vm505, %v586
        %s589 = sand.u32 %s188, 1
        %s590 = scalar_lea.sflag [#allocation3], %s589
        %s591 = sand.u32 %s188, 1
        %s592 = smul.addr %s591, 4
        %s593 = scalar_lea.vmem [#allocation2], %s592
        %s594 = sand.u32 %s25, 1
        %s595 = scalar_lea.sflag [#allocation5], %s594
        %s596 = sand.u32 %s218, 1
        %s597 = smul.addr %s596, 4
        %s598 = scalar_lea.vmem [#allocation4], %s597
        %s599 = sand.u32 %s25, 1
        %s600 = scalar_lea.sflag [#allocation5], %s599
        %s601 = sand.u32 %s248, 1
        %s602 = smul.addr %s601, 4
        %s603 = scalar_lea.vmem [#allocation6], %s602
        // Predicated region
        $region41: #{tpu_custom_call.1} parent=39 // pred_check
          %p604 = pneg %p198
        $region42: #{tpu_custom_call.1} parent=39 // pred_check_branch
          %606 = sbr.rel (%p604) target = $region44
        $region43: #{tpu_custom_call.1} parent=39 // pred_region
          %s608 = ssub.s32 64, 64
          %609 = vsyncadd %s590, %s608
          %s610 = sadd.s32 %s32, %s30
          %s611 = smul.addr %s31, 4
          %s612 = sadd.s32 %s610, %s611
          %s613 = smul.addr %s612, 64
          %s614 = scalar_lea.hbm %s5, %s613
          %s616 = sshll.u32 %s593, 4
          %s617 = int_to_ptr.vmem [resolvable:$true] %s616
          %619 = dma.vmem_to_hbm [thread:$0]  %s617, 64, %s614, %s590
        $region44: #{tpu_custom_call.1} parent=39 // pred_fallthru
          _
        // Predicated region
        $region45: #{tpu_custom_call.1} parent=39 // pred_check
          %p620 = pneg %p228
        $region46: #{tpu_custom_call.1} parent=39 // pred_check_branch
          %622 = sbr.rel (%p620) target = $region48
        $region47: #{tpu_custom_call.1} parent=39 // pred_region
          %s624 = ssub.s32 64, 64
          %625 = vsyncadd %s595, %s624
          %s626 = sadd.s32 %s32, %s30
          %s627 = smul.addr %s31, 4
          %s628 = sadd.s32 %s626, %s627
          %s629 = smul.addr %s628, 64
          %s630 = scalar_lea.hbm %s6, %s629
          %s632 = sshll.u32 %s598, 4
          %s633 = int_to_ptr.vmem [resolvable:$true] %s632
          %635 = dma.vmem_to_hbm [thread:$0]  %s633, 64, %s630, %s595
        $region48: #{tpu_custom_call.1} parent=39 // pred_fallthru
          _
        // Predicated region
        $region49: #{tpu_custom_call.1} parent=39 // pred_check
          %p636 = pneg %p258
        $region50: #{tpu_custom_call.1} parent=39 // pred_check_branch
          %638 = sbr.rel (%p636) target = $region52
        $region51: #{tpu_custom_call.1} parent=39 // pred_region
          %s640 = ssub.s32 64, 64
          %641 = vsyncadd %s600, %s640
          %s642 = sadd.s32 %s32, %s30
          %s643 = smul.addr %s31, 4
          %s644 = sadd.s32 %s642, %s643
          %s645 = smul.addr %s644, 64
          %s646 = scalar_lea.hbm %s7, %s645
          %s648 = sshll.u32 %s603, 4
          %s649 = int_to_ptr.vmem [resolvable:$true] %s648
          %651 = dma.vmem_to_hbm [thread:$0]  %s649, 64, %s646, %s600
        $region52: #{tpu_custom_call.1} parent=39 // pred_fallthru
          _
      $region40: #{tpu_custom_call.1} parent=5 // pred_fallthru
        _
      %p652 = scmp.le.s32.totalorder 2, %s20
      // Predicated region
      $region53: #{tpu_custom_call.1} parent=5 // pred_check
        %p653 = pneg %p652
      $region54: #{tpu_custom_call.1} parent=5 // pred_check_branch
        %655 = sbr.rel (%p653) target = $region56
      $region55: #{tpu_custom_call.1} parent=5 // pred_region
        %s656 = ssub.s32 %s20, 2
        // Predicated region
        $region57: #{tpu_custom_call.1} parent=55 // pred_check
          %p657 = pneg %p204
        $region58: #{tpu_custom_call.1} parent=55 // pred_check_branch
          %659 = sbr.rel (%p657) target = $region60
        $region59: #{tpu_custom_call.1} parent=55 // pred_region
          %s660 = sand.u32 %s189, 1
          %s661 = scalar_lea.sflag [#allocation3], %s660
          %s662 = sand.u32 %s189, 1
          %s663 = smul.addr %s662, 4
          %s664 = scalar_lea.vmem [#allocation2], %s663
          %665 = dma.done %s661, 64
        $region60: #{tpu_custom_call.1} parent=55 // pred_fallthru
          _
        // Predicated region
        $region61: #{tpu_custom_call.1} parent=55 // pred_check
          %p666 = pneg %p234
        $region62: #{tpu_custom_call.1} parent=55 // pred_check_branch
          %668 = sbr.rel (%p666) target = $region64
        $region63: #{tpu_custom_call.1} parent=55 // pred_region
          %s669 = sand.u32 %s26, 1
          %s670 = scalar_lea.sflag [#allocation5], %s669
          %s671 = sand.u32 %s219, 1
          %s672 = smul.addr %s671, 4
          %s673 = scalar_lea.vmem [#allocation4], %s672
          %674 = dma.done %s670, 64
        $region64: #{tpu_custom_call.1} parent=55 // pred_fallthru
          _
        // Predicated region
        $region65: #{tpu_custom_call.1} parent=55 // pred_check
          %p675 = pneg %p264
        $region66: #{tpu_custom_call.1} parent=55 // pred_check_branch
          %677 = sbr.rel (%p675) target = $region68
        $region67: #{tpu_custom_call.1} parent=55 // pred_region
          %s678 = sand.u32 %s26, 1
          %s679 = scalar_lea.sflag [#allocation5], %s678
          %s680 = sand.u32 %s249, 1
          %s681 = smul.addr %s680, 4
          %s682 = scalar_lea.vmem [#allocation6], %s681
          %683 = dma.done %s679, 64
        $region68: #{tpu_custom_call.1} parent=55 // pred_fallthru
          _
      $region56: #{tpu_custom_call.1} parent=5 // pred_fallthru
        _
    $region6: #{tpu_custom_call.1} parent=1 // loop_footer
      %s24 = sadd.s32 1, %s20
    $region7: #{tpu_custom_call.1} parent=1 // loop_footer_branch
      %19 = sbr.rel target = $region3
    $region8: #{tpu_custom_call.1} parent=1 // loop_exit
      _
    %684 = vsyncpa [#allocation3], 1
    %s685 = scalar_lea.sflag [#allocation3], 1
    %686 = vsyncpa %s685, 1
    %687 = vsyncpa [#allocation5], 1
    %s688 = scalar_lea.sflag [#allocation5], 1
    %689 = vsyncpa %s688, 1

// kernel: tpu_custom_call.1
$region0: #{tpu_custom_call.1}
  #allocation0 [shape = 'u32[]', space=smem, size = 0x4, offset = 0x4, fixed_abs, tag = 'smem constant byte address 0x4 - core index']
  #allocation1 [shape = 'u32[144,128]{1,0:T(1,128)}', space=vmem, size = 0x12000, scoped, tag = 'internal scratch']
  %s0 = inlined_call_operand.vmem [shape: f32[2,8,32], index: 0, kind: input, shape index: {}]
  %s1 = inlined_call_operand.vmem [shape: bf16[4,32,24], index: 1, kind: input, shape index: {}]
  %s2 = inlined_call_operand.vmem [shape: f32[4,1,24], index: 2, kind: input, shape index: {}]
  %s3 = inlined_call_operand.vmem [shape: f32[8,2], index: 3, kind: input, shape index: {}]
  %s4 = inlined_call_operand.vmem [shape: f32[8,2], index: 4, kind: input, shape index: {}]
  %s5 = inlined_call_operand.hbm [shape: bf16[2,4,8,8], index: 5, kind: output, shape index: {0}]
  %s6 = inlined_call_operand.hbm [shape: bf16[2,4,8,8], index: 6, kind: output, shape index: {1}]
  %s7 = inlined_call_operand.hbm [shape: bf16[2,4,8,8], index: 7, kind: output, shape index: {2}]
  %8 = xla_tuple %s5, %s6, %s7
  %s9 = sld [smem:[#allocation0]]
  $region69: #{tpu_custom_call.1} parent=0
    _
  %s11 = ssub.s32 1, %s9
  %s12 = scalar_select 0, %s11, %s9
  $region1: #{tpu_custom_call.1} parent=0
    #allocation2 [shape = 'u8[4096]{0}', space=vmem, size = 0x1000, scoped, tag = 'output window, operand 0']
    #allocation3 [shape = 's32[2]{0}', space=sflag, size = 0x8, scoped, tag = 'scoped memory for tpu_custom_call.1']
    #allocation4 [shape = 'u8[4096]{0}', space=vmem, size = 0x1000, scoped, tag = 'output window, operand 1']
    #allocation5 [shape = 's32[2]{0}', space=sflag, size = 0x8, scoped, tag = 'scoped memory for tpu_custom_call.1']
    #allocation6 [shape = 'u8[4096]{0}', space=vmem, size = 0x1000, scoped, tag = 'output window, operand 2']
    %13 = vsyncpa [#allocation3], 0
    %s14 = scalar_lea.sflag [#allocation3], 1
    %15 = vsyncpa %s14, 0
    %16 = vsyncpa [#allocation5], 0
    %s17 = scalar_lea.sflag [#allocation5], 1
    %18 = vsyncpa %s17, 0
    loop: start=0, step=1, limit=10
    $region2: #{tpu_custom_call.1} parent=1 // loop_pre_header
      _
    $region3: #{tpu_custom_call.1} parent=1 // loop_header
      %s20 = sphi 0, %s24
      %p21 = scmp.ge.s32.totalorder %s20, 10
      %s27 = sphi 0, %s46
      %s28 = sphi 0, %s42
      %s29 = sphi 0, %s38
      %s30 = sphi 0, %s27
      %s31 = sphi 0, %s28
      %s32 = sphi 0, %s29
      %s33 = sphi 0, %s30
      %s34 = sphi 0, %s31
      %s35 = sphi 0, %s32
      %s51 = sphi 0, %s53
      %s54 = sphi 0, %s51
      %s55 = sphi 0, %s54
      %s71 = sphi 0, %s55
      %s77 = sphi 0, %s79
      %s80 = sphi 0, %s77
      %s81 = sphi 0, %s80
      %s97 = sphi 0, %s81
      %s103 = sphi 0, %s105
      %s106 = sphi 0, %s103
      %s107 = sphi 0, %s106
      %s123 = sphi 0, %s107
      %s129 = sphi 0, %s131
      %s132 = sphi 0, %s129
      %s133 = sphi 0, %s132
      %s149 = sphi 0, %s133
      %s155 = sphi 0, %s157
      %s158 = sphi 0, %s155
      %s159 = sphi 0, %s158
      %s175 = sphi 0, %s159
      %s185 = sphi 0, %s187
      %s188 = sphi 0, %s185
      %s189 = sphi 0, %s188
      %s205 = sphi 0, %s189
      %s215 = sphi 0, %s217
      %s218 = sphi 0, %s215
      %s219 = sphi 0, %s218
      %s235 = sphi 0, %s219
      %s245 = sphi 0, %s247
      %s248 = sphi 0, %s245
      %s249 = sphi 0, %s248
      %s265 = sphi 0, %s249
    $region4: #{tpu_custom_call.1} parent=1 // loop_header_branch
      %23 = sbr.rel (%p21) target = $region8
    $region5: #{tpu_custom_call.1} parent=1 // loop_body
      %s25 = ssub.s32 %s20, 1
      %s26 = ssub.s32 %s20, 2
      %s36 = sadd.s32 1, %s29
      %p37 = scmp.ge.s32.totalorder %s36, 1
      %s38 = scalar_select %p37, 0, %s36
      %s39 = sadd.s32 1, %s28
      %s40 = scalar_select %p37, %s39, %s28
      %p41 = scmp.ge.s32.totalorder %s40, 2
      %s42 = scalar_select %p41, 0, %s40
      %s43 = sadd.s32 1, %s27
      %s44 = scalar_select %p41, %s43, %s27
      %p45 = scmp.ge.s32.totalorder %s44, 4
      %s46 = scalar_select %p45, 0, %s44
      %s47 = ssub.s32 %s28, %s42
      %s48 = ssub.s32 %s29, %s38
      %s49 = sor.u32 %s47, %s48
      %p50 = scmp.eq.s32.totalorder %s49, 0
      %s52 = sadd.s32 %s51, 1
      %s53 = scalar_select %p50, %s51, %s52
      %p56 = pneg %p50
      %p57 = scmp.eq.s32.totalorder %s20, 7
      %p58 = por %p56, %p57
      %p59 = scmp.ne.s32.totalorder %s51, %s54
      %p60 = scmp.eq.s32.totalorder %s20, 0
      %p61 = por %p59, %p60
      %p62 = scmp.ne.s32.totalorder %s51, %s54
      %p63 = scmp.eq.s32.totalorder %s25, 7
      %p64 = por %p62, %p63
      %p65 = scmp.ne.s32.totalorder %s54, %s55
      %p66 = scmp.eq.s32.totalorder %s25, 0
      %p67 = por %p65, %p66
      %p68 = scmp.ne.s32.totalorder %s54, %s55
      %p69 = scmp.eq.s32.totalorder %s26, 7
      %p70 = por %p68, %p69
      %p72 = scmp.ne.s32.totalorder %s55, %s71
      %p73 = scmp.eq.s32.totalorder %s26, 0
      %p74 = por %p72, %p73
      %s75 = ssub.s32 %s27, %s46
      %p76 = scmp.eq.s32.totalorder %s75, 0
      %s78 = sadd.s32 %s77, 1
      %s79 = scalar_select %p76, %s77, %s78
      %p82 = pneg %p76
      %p83 = scmp.eq.s32.totalorder %s20, 7
      %p84 = por %p82, %p83
      %p85 = scmp.ne.s32.totalorder %s77, %s80
      %p86 = scmp.eq.s32.totalorder %s20, 0
      %p87 = por %p85, %p86
      %p88 = scmp.ne.s32.totalorder %s77, %s80
      %p89 = scmp.eq.s32.totalorder %s25, 7
      %p90 = por %p88, %p89
      %p91 = scmp.ne.s32.totalorder %s80, %s81
      %p92 = scmp.eq.s32.totalorder %s25, 0
      %p93 = por %p91, %p92
      %p94 = scmp.ne.s32.totalorder %s80, %s81
      %p95 = scmp.eq.s32.totalorder %s26, 7
      %p96 = por %p94, %p95
      %p98 = scmp.ne.s32.totalorder %s81, %s97
      %p99 = scmp.eq.s32.totalorder %s26, 0
      %p100 = por %p98, %p99
      %s101 = ssub.s32 %s27, %s46
      %p102 = scmp.eq.s32.totalorder %s101, 0
      %s104 = sadd.s32 %s103, 1
      %s105 = scalar_select %p102, %s103, %s104
      %p108 = pneg %p102
      %p109 = scmp.eq.s32.totalorder %s20, 7
      %p110 = por %p108, %p109
      %p111 = scmp.ne.s32.totalorder %s103, %s106
      %p112 = scmp.eq.s32.totalorder %s20, 0
      %p113 = por %p111, %p112
      %p114 = scmp.ne.s32.totalorder %s103, %s106
      %p115 = scmp.eq.s32.totalorder %s25, 7
      %p116 = por %p114, %p115
      %p117 = scmp.ne.s32.totalorder %s106, %s107
      %p118 = scmp.eq.s32.totalorder %s25, 0
      %p119 = por %p117, %p118
      %p120 = scmp.ne.s32.totalorder %s106, %s107
      %p121 = scmp.eq.s32.totalorder %s26, 7
      %p122 = por %p120, %p121
      %p124 = scmp.ne.s32.totalorder %s107, %s123
      %p125 = scmp.eq.s32.totalorder %s26, 0
      %p126 = por %p124, %p125
      %s127 = ssub.s32 %s29, %s38
      %p128 = scmp.eq.s32.totalorder %s127, 0
      %s130 = sadd.s32 %s129, 1
      %s131 = scalar_select %p128, %s129, %s130
      %p134 = pneg %p128
      %p135 = scmp.eq.s32.totalorder %s20, 7
      %p136 = por %p134, %p135
      %p137 = scmp.ne.s32.totalorder %s129, %s132
      %p138 = scmp.eq.s32.totalorder %s20, 0
      %p139 = por %p137, %p138
      %p140 = scmp.ne.s32.totalorder %s129, %s132
      %p141 = scmp.eq.s32.totalorder %s25, 7
      %p142 = por %p140, %p141
      %p143 = scmp.ne.s32.totalorder %s132, %s133
      %p144 = scmp.eq.s32.totalorder %s25, 0
      %p145 = por %p143, %p144
      %p146 = scmp.ne.s32.totalorder %s132, %s133
      %p147 = scmp.eq.s32.totalorder %s26, 7
      %p148 = por %p146, %p147
      %p150 = scmp.ne.s32.totalorder %s133, %s149
      %p151 = scmp.eq.s32.totalorder %s26, 0
      %p152 = por %p150, %p151
      %s153 = ssub.s32 %s29, %s38
      %p154 = scmp.eq.s32.totalorder %s153, 0
      %s156 = sadd.s32 %s155, 1
      %s157 = scalar_select %p154, %s155, %s156
      %p160 = pneg %p154
      %p161 = scmp.eq.s32.totalorder %s20, 7
      %p162 = por %p160, %p161
      %p163 = scmp.ne.s32.totalorder %s155, %s158
      %p164 = scmp.eq.s32.totalorder %s20, 0
      %p165 = por %p163, %p164
      %p166 = scmp.ne.s32.totalorder %s155, %s158
      %p167 = scmp.eq.s32.totalorder %s25, 7
      %p168 = por %p166, %p167
      %p169 = scmp.ne.s32.totalorder %s158, %s159
      %p170 = scmp.eq.s32.totalorder %s25, 0
      %p171 = por %p169, %p170
      %p172 = scmp.ne.s32.totalorder %s158, %s159
      %p173 = scmp.eq.s32.totalorder %s26, 7
      %p174 = por %p172, %p173
      %p176 = scmp.ne.s32.totalorder %s159, %s175
      %p177 = scmp.eq.s32.totalorder %s26, 0
      %p178 = por %p176, %p177
      %s179 = ssub.s32 %s28, %s42
      %s180 = ssub.s32 %s27, %s46
      %s181 = sor.u32 %s179, %s180
      %s182 = ssub.s32 %s29, %s38
      %s183 = sor.u32 %s181, %s182
      %p184 = scmp.eq.s32.totalorder %s183, 0
      %s186 = sadd.s32 %s185, 1
      %s187 = scalar_select %p184, %s185, %s186
      %p190 = pneg %p184
      %p191 = scmp.eq.s32.totalorder %s20, 7
      %p192 = por %p190, %p191
      %p193 = scmp.ne.s32.totalorder %s185, %s188
      %p194 = scmp.eq.s32.totalorder %s20, 0
      %p195 = por %p193, %p194
      %p196 = scmp.ne.s32.totalorder %s185, %s188
      %p197 = scmp.eq.s32.totalorder %s25, 7
      %p198 = por %p196, %p197
      %p199 = scmp.ne.s32.totalorder %s188, %s189
      %p200 = scmp.eq.s32.totalorder %s25, 0
      %p201 = por %p199, %p200
      %p202 = scmp.ne.s32.totalorder %s188, %s189
      %p203 = scmp.eq.s32.totalorder %s26, 7
      %p204 = por %p202, %p203
      %p206 = scmp.ne.s32.totalorder %s189, %s205
      %p207 = scmp.eq.s32.totalorder %s26, 0
      %p208 = por %p206, %p207
      %s209 = ssub.s32 %s28, %s42
      %s210 = ssub.s32 %s27, %s46
      %s211 = sor.u32 %s209, %s210
      %s212 = ssub.s32 %s29, %s38
      %s213 = sor.u32 %s211, %s212
      %p214 = scmp.eq.s32.totalorder %s213, 0
      %s216 = sadd.s32 %s215, 1
      %s217 = scalar_select %p214, %s215, %s216
      %p220 = pneg %p214
      %p221 = scmp.eq.s32.totalorder %s20, 7
      %p222 = por %p220, %p221
      %p223 = scmp.ne.s32.totalorder %s215, %s218
      %p224 = scmp.eq.s32.totalorder %s20, 0
      %p225 = por %p223, %p224
      %p226 = scmp.ne.s32.totalorder %s215, %s218
      %p227 = scmp.eq.s32.totalorder %s25, 7
      %p228 = por %p226, %p227
      %p229 = scmp.ne.s32.totalorder %s218, %s219
      %p230 = scmp.eq.s32.totalorder %s25, 0
      %p231 = por %p229, %p230
      %p232 = scmp.ne.s32.totalorder %s218, %s219
      %p233 = scmp.eq.s32.totalorder %s26, 7
      %p234 = por %p232, %p233
      %p236 = scmp.ne.s32.totalorder %s219, %s235
      %p237 = scmp.eq.s32.totalorder %s26, 0
      %p238 = por %p236, %p237
      %s239 = ssub.s32 %s28, %s42
      %s240 = ssub.s32 %s27, %s46
      %s241 = sor.u32 %s239, %s240
      %s242 = ssub.s32 %s29, %s38
      %s243 = sor.u32 %s241, %s242
      %p244 = scmp.eq.s32.totalorder %s243, 0
      %s246 = sadd.s32 %s245, 1
      %s247 = scalar_select %p244, %s245, %s246
      %p250 = pneg %p244
      %p251 = scmp.eq.s32.totalorder %s20, 7
      %p252 = por %p250, %p251
      %p253 = scmp.ne.s32.totalorder %s245, %s248
      %p254 = scmp.eq.s32.totalorder %s20, 0
      %p255 = por %p253, %p254
      %p256 = scmp.ne.s32.totalorder %s245, %s248
      %p257 = scmp.eq.s32.totalorder %s25, 7
      %p258 = por %p256, %p257
      %p259 = scmp.ne.s32.totalorder %s248, %s249
      %p260 = scmp.eq.s32.totalorder %s25, 0
      %p261 = por %p259, %p260
      %p262 = scmp.ne.s32.totalorder %s248, %s249
      %p263 = scmp.eq.s32.totalorder %s26, 7
      %p264 = por %p262, %p263
      %p266 = scmp.ne.s32.totalorder %s249, %s265
      %p267 = scmp.eq.s32.totalorder %s26, 0
      %p268 = por %p266, %p267
      %p269 = scmp.le.s32.totalorder 1, %s20
      %p270 = scmp.lt.s32.totalorder %s20, 9
      %p271 = pnand %p269, %p270
      %p272 = pneg %p271
      // Predicated region
      $region9: #{tpu_custom_call.1} parent=5 // pred_check
        _
      $region10: #{tpu_custom_call.1} parent=5 // pred_check_branch
        %274 = sbr.rel (%p271) target = $region12
      $region11: #{tpu_custom_call.1} parent=5 // pred_region
        %s275 = ssub.s32 %s20, 1
        // Predicated region
        $region13: #{tpu_custom_call.1} parent=11 // pred_check
          %p276 = pneg %p145
        $region14: #{tpu_custom_call.1} parent=11 // pred_check_branch
          %278 = sbr.rel (%p276) target = $region16
        $region15: #{tpu_custom_call.1} parent=11 // pred_region
          %p279 = scmp.lt.s32.totalorder %s32, 0
          %s280 = scalar_select %p279, %s32, 0
          %s281 = smul.addr %s280, 8
          %s282 = scalar_lea.vmem %s3, %s281
        $region16: #{tpu_custom_call.1} parent=11 // pred_fallthru
          _
        // Predicated region
        $region17: #{tpu_custom_call.1} parent=11 // pred_check
          %p283 = pneg %p171
        $region18: #{tpu_custom_call.1} parent=11 // pred_check_branch
          %285 = sbr.rel (%p283) target = $region20
        $region19: #{tpu_custom_call.1} parent=11 // pred_region
          %p286 = scmp.lt.s32.totalorder %s32, 0
          %s287 = scalar_select %p286, %s32, 0
          %s288 = smul.addr %s287, 8
          %s289 = scalar_lea.vmem %s4, %s288
        $region20: #{tpu_custom_call.1} parent=11 // pred_fallthru
          _
      $region12: #{tpu_custom_call.1} parent=5 // pred_fallthru
        _
      %p290 = scmp.lt.s32.totalorder %s20, 8
      // Predicated region
      $region21: #{tpu_custom_call.1} parent=5 // pred_check
        %p291 = pneg %p290
      $region22: #{tpu_custom_call.1} parent=5 // pred_check_branch
        %293 = sbr.rel (%p291) target = $region24
      $region23: #{tpu_custom_call.1} parent=5 // pred_region
        // Predicated region
        $region25: #{tpu_custom_call.1} parent=23 // pred_check
          %p294 = pneg %p61
        $region26: #{tpu_custom_call.1} parent=23 // pred_check_branch
          %296 = sbr.rel (%p294) target = $region28
        $region27: #{tpu_custom_call.1} parent=23 // pred_region
          %p297 = scmp.lt.s32.totalorder %s28, 1
          %s298 = scalar_select %p297, %s28, 1
          %p299 = scmp.lt.s32.totalorder %s29, 0
          %s300 = scalar_select %p299, %s29, 0
          %s301 = sadd.s32 %s300, %s298
          %s302 = smul.addr %s301, 8
          %s303 = scalar_lea.vmem %s0, %s302
        $region28: #{tpu_custom_call.1} parent=23 // pred_fallthru
          _
        // Predicated region
        $region29: #{tpu_custom_call.1} parent=23 // pred_check
          %p304 = pneg %p87
        $region30: #{tpu_custom_call.1} parent=23 // pred_check_branch
          %306 = sbr.rel (%p304) target = $region32
        $region31: #{tpu_custom_call.1} parent=23 // pred_region
          %p307 = scmp.lt.s32.totalorder %s27, 3
          %s308 = scalar_select %p307, %s27, 3
          %s309 = smul.addr %s308, 4
          %s310 = smul.addr %s309, 4
          %s311 = scalar_lea.vmem %s1, %s310
        $region32: #{tpu_custom_call.1} parent=23 // pred_fallthru
          _
        // Predicated region
        $region33: #{tpu_custom_call.1} parent=23 // pred_check
          %p312 = pneg %p113
        $region34: #{tpu_custom_call.1} parent=23 // pred_check_branch
          %314 = sbr.rel (%p312) target = $region36
        $region35: #{tpu_custom_call.1} parent=23 // pred_region
          %p315 = scmp.lt.s32.totalorder %s27, 3
          %s316 = scalar_select %p315, %s27, 3
          %s317 = scalar_lea.vmem %s2, %s316
        $region36: #{tpu_custom_call.1} parent=23 // pred_fallthru
          _
      $region24: #{tpu_custom_call.1} parent=5 // pred_fallthru
        _
      %p318 = scmp.le.s32.totalorder 1, %s20
      %p319 = scmp.lt.s32.totalorder %s20, 9
      %p320 = pnand %p318, %p319
      %p321 = pneg %p320
      // Predicated region
      $region37: #{tpu_custom_call.1} parent=5 // pred_check
        _
      $region38: #{tpu_custom_call.1} parent=5 // pred_check_branch
        %323 = sbr.rel (%p320) target = $region40
      $region39: #{tpu_custom_call.1} parent=5 // pred_region
        %s324 = ssub.s32 %s20, 1
        %p325 = scmp.lt.s32.totalorder %s31, 1
        %s326 = scalar_select %p325, %s31, 1
        %p327 = scmp.lt.s32.totalorder %s32, 0
        %s328 = scalar_select %p327, %s32, 0
        %s329 = sadd.s32 %s328, %s326
        %s330 = smul.addr %s329, 8
        %s331 = scalar_lea.vmem %s0, %s330
        %p332 = pneg %p67
        %p333 = pneg %p64
        %p334 = scmp.lt.s32.totalorder %s30, 3
        %s335 = scalar_select %p334, %s30, 3
        %s336 = smul.addr %s335, 4
        %s337 = smul.addr %s336, 4
        %s338 = scalar_lea.vmem %s1, %s337
        %p339 = pneg %p93
        %p340 = pneg %p90
        %p341 = scmp.lt.s32.totalorder %s30, 3
        %s342 = scalar_select %p341, %s30, 3
        %s343 = scalar_lea.vmem %s2, %s342
        %p344 = pneg %p119
        %p345 = pneg %p116
        %p346 = scmp.lt.s32.totalorder %s32, 0
        %s347 = scalar_select %p346, %s32, 0
        %s348 = smul.addr %s347, 8
        %s349 = scalar_lea.vmem %s3, %s348
        %p350 = pneg %p145
        %p351 = pneg %p142
        %p352 = scmp.lt.s32.totalorder %s32, 0
        %s353 = scalar_select %p352, %s32, 0
        %s354 = smul.addr %s353, 8
        %s355 = scalar_lea.vmem %s4, %s354
        %p356 = pneg %p171
        %p357 = pneg %p168
        %p358 = pneg %p201
        %p359 = pneg %p198
        %s360 = sand.u32 %s188, 1
        %s361 = scalar_lea.sflag [#allocation3], %s360
        %s362 = sand.u32 %s188, 1
        %s363 = smul.addr %s362, 4
        %s364 = scalar_lea.vmem [#allocation2], %s363
        %p365 = pneg %p231
        %p366 = pneg %p228
        %s367 = sand.u32 %s25, 1
        %s368 = scalar_lea.sflag [#allocation5], %s367
        %s369 = sand.u32 %s218, 1
        %s370 = smul.addr %s369, 4
        %s371 = scalar_lea.vmem [#allocation4], %s370
        %p372 = pneg %p261
        %p373 = pneg %p258
        %s374 = sand.u32 %s25, 1
        %s375 = scalar_lea.sflag [#allocation5], %s374
        %s376 = sand.u32 %s248, 1
        %s377 = smul.addr %s376, 4
        %s378 = scalar_lea.vmem [#allocation6], %s377
        %p379 = scmp.lt.s32.totalorder %s31, 1
        %s380 = scalar_select %p379, %s31, 1
        %p381 = scmp.lt.s32.totalorder %s32, 0
        %s382 = scalar_select %p381, %s32, 0
        %s383 = sadd.s32 %s382, %s380
        %s384 = smul.addr %s383, 8
        %s385 = scalar_lea.vmem %s0, %s384
        %p386 = scmp.lt.s32.totalorder %s30, 3
        %s387 = scalar_select %p386, %s30, 3
        %s388 = smul.addr %s387, 4
        %s389 = smul.addr %s388, 4
        %s390 = scalar_lea.vmem %s1, %s389
        %p391 = scmp.lt.s32.totalorder %s30, 3
        %s392 = scalar_select %p391, %s30, 3
        %s393 = scalar_lea.vmem %s2, %s392
        %p394 = scmp.lt.s32.totalorder %s32, 0
        %s395 = scalar_select %p394, %s32, 0
        %s396 = smul.addr %s395, 8
        %s397 = scalar_lea.vmem %s3, %s396
        %p398 = scmp.lt.s32.totalorder %s32, 0
        %s399 = scalar_select %p398, %s32, 0
        %s400 = smul.addr %s399, 8
        %s401 = scalar_lea.vmem %s4, %s400
        %v403 = vld [vmem:[%s385] sm:$0xff]
        %v404 = vpack.c.bf16 %v403, %v403
        %v405 = vld [vmem:[%s390] sm:$0xf]
        %v406 = vld [vmem:[%s390 + $0x4] sm:$0xf]
        %v407 = vld [vmem:[%s390 + $0x8] sm:$0xf]
        %v408 = vld [vmem:[%s390 + $0xc] sm:$0xf]
        %v409 = vld [vmem:[%s393] sm:$0x1]
        %v411 = vlaneseq
        %v412 = vshrl.u32 %v411, 7
        %v413 = vsub.s32 0, %v412
        %v414 = vrot.slane %v409, %v413
        %v420 = vunpack.c.l.b16 %v405
        %v421 = vunpack.c.l.b16 %v406
        %v422 = vunpack.c.l.b16 %v407
        %v423 = vunpack.c.l.b16 %v408
        %v424 = vpack.c.b16 %v421, %v420
        %v425 = vpack.c.b16 %v423, %v422
        %vm428 = vcmask 261120
        %v430 = vsel %vm428, %v404, 0
        %432 = vmatprep.subr.bf16.mxu0 0
        %433 = vmatpush1.bf16.msra.mxu0 %v424
        %434 = vmatprep.subr.bf16.mxu0 0
        %435 = vmatpush1.bf16.msra.mxu0 %v425
        %436 = vmatprep.subr.bf16.mxu0 0
        %437 = vmatpush1.bf16.msra.mxu0 0
        %438 = vmatprep.subr.bf16.mxu0 0
        %439 = vmatpush1.bf16.msra.mxu0 0
        %440 = vmatprep.subr.bf16.mxu0 0
        %441 = vmatpush1.bf16.msra.mxu0 0
        %442 = vmatprep.subr.bf16.mxu0 0
        %443 = vmatpush1.bf16.msra.mxu0 0
        %444 = vmatprep.subr.bf16.mxu0 0
        %445 = vmatpush1.bf16.msra.mxu0 0
        %446 = vmatprep.subr.bf16.mxu0 0
        %447 = vmatpush1.bf16.msra.mxu0 0
        %448 = vmatprep.subr.bf16.mxu0 0
        %449 = vmatpush1.bf16.msra.mxu0 0
        %450 = vmatprep.subr.bf16.mxu0 0
        %451 = vmatpush1.bf16.msra.mxu0 0
        %452 = vmatprep.subr.bf16.mxu0 0
        %453 = vmatpush1.bf16.msra.mxu0 0
        %454 = vmatprep.subr.bf16.mxu0 0
        %455 = vmatpush1.bf16.msra.mxu0 0
        %456 = vmatprep.subr.bf16.mxu0 0
        %457 = vmatpush1.bf16.msra.mxu0 0
        %458 = vmatprep.subr.bf16.mxu0 0
        %459 = vmatpush1.bf16.msra.mxu0 0
        %460 = vmatprep.subr.bf16.mxu0 0
        %461 = vmatpush1.bf16.msra.mxu0 0
        %462 = vmatprep.subr.bf16.mxu0 0
        %463 = vmatpush1.bf16.msra.mxu0 0
        %464 = vmatprep.mubr.bf16.mxu0 0
        %465 = vmatmul.mubr.bf16.gmra.mrb[0].mxu0 %v430
        %v466 = vpop.f32.mrb[0].mxu0
        %v467 = vadd.f32 %v414, %v466
        %v468 = vpop.f32.mrb[0].mxu0
        %v469 = vpop.f32.mrb[0].mxu0
        %v470 = vpop.f32.mrb[0].mxu0
        %471 = vdwg.mxu0
        %v472 = vld [vmem:[%s397] sm:$0xff]
        %v473 = vld [vmem:[%s401] sm:$0xff]
        %v474 = vmul.f32 %v467, %v472
        %476 = vrot.lane.b32.xlu0 %v473, 2
        %v477 = vpop.permute.xlu0 %476
        %v479 = vmul.f32 %v467, %v477
        %481 = vrot.lane.b32.xlu0 %v479, 126
        %v482 = vpop.permute.xlu0 %481
        %v484 = vsub.f32 %v474, %v482
        %v485 = vmul.f32 %v467, %v473
        %487 = vrot.lane.b32.xlu0 %v472, 2
        %v488 = vpop.permute.xlu0 %487
        %v490 = vmul.f32 %v467, %v488
        %492 = vrot.lane.b32.xlu0 %v490, 126
        %v493 = vpop.permute.xlu0 %492
        %v495 = vadd.f32 %v485, %v493
        %497 = vrot.lane.b32.xlu0 %v495, 2
        %v498 = vpop.permute.xlu0 %497
        %vm500 = vcmask 15360
        %v501 = vsel %vm500, %v484, %v498
        %vm502 = vcmask 31744
        %v503 = vsel %vm502, %v501, %v467
        %v504 = vpack.c.bf16 %v503, %v503
        %vm505 = vcmask 60416
        %506 = vst.msk [vmem:[%s364] sm:$0xf] %vm505, %v504
        %507 = vrot.lane.b32.xlu0 %v472, 8
        %v508 = vpop.permute.xlu0 %507
        %v510 = vmul.f32 %v467, %v508
        %511 = vrot.lane.b32.xlu0 %v473, 10
        %v512 = vpop.permute.xlu0 %511
        %v514 = vmul.f32 %v467, %v512
        %516 = vrot.lane.b32.xlu0 %v514, 126
        %v517 = vpop.permute.xlu0 %516
        %v519 = vsub.f32 %v510, %v517
        %520 = vrot.lane.b32.xlu0 %v473, 8
        %v521 = vpop.permute.xlu0 %520
        %v523 = vmul.f32 %v467, %v521
        %524 = vrot.lane.b32.xlu0 %v472, 10
        %v525 = vpop.permute.xlu0 %524
        %v527 = vmul.f32 %v467, %v525
        %529 = vrot.lane.b32.xlu0 %v527, 126
        %v530 = vpop.permute.xlu0 %529
        %v532 = vadd.f32 %v523, %v530
        %534 = vrot.lane.b32.xlu0 %v519, 120
        %v535 = vpop.permute.xlu0 %534
        %538 = vrot.lane.b32.xlu0 %v532, 122
        %v539 = vpop.permute.xlu0 %538
        %v541 = vsel %vm500, %v535, %v539
        %543 = vrot.lane.b32.xlu0 %v467, 120
        %v544 = vpop.permute.xlu0 %543
        %v546 = vsel %vm502, %v541, %v544
        %547 = vxpose.xlu0.b32.start [1/16] %v546, 128
        %548 = vxpose.xlu0.b32.cont [2/16] 0.0, 128
        %549 = vxpose.xlu0.b32.cont [3/16] 0.0, 128
        %550 = vxpose.xlu0.b32.cont [4/16] 0.0, 128
        %551 = vxpose.xlu0.b32.cont [5/16] 0.0, 128
        %552 = vxpose.xlu0.b32.cont [6/16] 0.0, 128
        %553 = vxpose.xlu0.b32.cont [7/16] 0.0, 128
        %554 = vxpose.xlu0.b32.cont [8/16] 0.0, 128
        %555 = vxpose.xlu0.b32.cont [9/16] 0.0, 128
        %556 = vxpose.xlu0.b32.cont [10/16] 0.0, 128
        %557 = vxpose.xlu0.b32.cont [11/16] 0.0, 128
        %558 = vxpose.xlu0.b32.cont [12/16] 0.0, 128
        %559 = vxpose.xlu0.b32.cont [13/16] 0.0, 128
        %560 = vxpose.xlu0.b32.cont [14/16] 0.0, 128
        %561 = vxpose.xlu0.b32.cont [15/16] 0.0, 128
        %562 = vxpose.xlu0.b32.end [16/16] 0.0, 128
        %v563 = vpop.trf.xlu0
        %v564 = vpop.trf.xlu0
        %v565 = vpop.trf.xlu0
        %v566 = vpop.trf.xlu0
        %v567 = vpop.trf.xlu0
        %v568 = vpop.trf.xlu0
        %v569 = vpop.trf.xlu0
        %v570 = vpop.trf.xlu0
        %v571 = vpop.trf.xlu0
        %v572 = vpop.trf.xlu0
        %v573 = vpop.trf.xlu0
        %v574 = vpop.trf.xlu0
        %v575 = vpop.trf.xlu0
        %v576 = vpop.trf.xlu0
        %v577 = vpop.trf.xlu0
        %v578 = vpop.trf.xlu0
        %v579 = vpack.c.bf16 %v563, %v563
        %580 = vst.msk [vmem:[%s371] sm:$0xf] %vm505, %v579
        %v581 = vpack.c.bf16 %v467, %v467
        %v583 = vunpack.c.l.b16 %v581
        %v584 = vpack.c.b16 %v583, %v583
        %585 = vrot.lane.b32.xlu0 %v584, 112
        %v586 = vpop.permute.xlu0 %585
        %588 = vst.msk [vmem:[%s378] sm:$0xf] %vm505, %v586
        %s589 = sand.u32 %s188, 1
        %s590 = scalar_lea.sflag [#allocation3], %s589
        %s591 = sand.u32 %s188, 1
        %s592 = smul.addr %s591, 4
        %s593 = scalar_lea.vmem [#allocation2], %s592
        %s594 = sand.u32 %s25, 1
        %s595 = scalar_lea.sflag [#allocation5], %s594
        %s596 = sand.u32 %s218, 1
        %s597 = smul.addr %s596, 4
        %s598 = scalar_lea.vmem [#allocation4], %s597
        %s599 = sand.u32 %s25, 1
        %s600 = scalar_lea.sflag [#allocation5], %s599
        %s601 = sand.u32 %s248, 1
        %s602 = smul.addr %s601, 4
        %s603 = scalar_lea.vmem [#allocation6], %s602
        // Predicated region
        $region41: #{tpu_custom_call.1} parent=39 // pred_check
          %p604 = pneg %p198
        $region42: #{tpu_custom_call.1} parent=39 // pred_check_branch
          %606 = sbr.rel (%p604) target = $region44
        $region43: #{tpu_custom_call.1} parent=39 // pred_region
          %s608 = ssub.s32 64, 64
          %609 = vsyncadd %s590, %s608
          %s610 = sadd.s32 %s32, %s30
          %s611 = smul.addr %s31, 4
          %s612 = sadd.s32 %s610, %s611
          %s613 = smul.addr %s612, 64
          %s614 = scalar_lea.hbm %s5, %s613
          %s616 = sshll.u32 %s593, 4
          %s617 = int_to_ptr.vmem [resolvable:$true] %s616
          %619 = dma.vmem_to_hbm [thread:$0]  %s617, 64, %s614, %s590
        $region44: #{tpu_custom_call.1} parent=39 // pred_fallthru
          _
        // Predicated region
        $region45: #{tpu_custom_call.1} parent=39 // pred_check
          %p620 = pneg %p228
        $region46: #{tpu_custom_call.1} parent=39 // pred_check_branch
          %622 = sbr.rel (%p620) target = $region48
        $region47: #{tpu_custom_call.1} parent=39 // pred_region
          %s624 = ssub.s32 64, 64
          %625 = vsyncadd %s595, %s624
          %s626 = sadd.s32 %s32, %s30
          %s627 = smul.addr %s31, 4
          %s628 = sadd.s32 %s626, %s627
          %s629 = smul.addr %s628, 64
          %s630 = scalar_lea.hbm %s6, %s629
          %s632 = sshll.u32 %s598, 4
          %s633 = int_to_ptr.vmem [resolvable:$true] %s632
          %635 = dma.vmem_to_hbm [thread:$0]  %s633, 64, %s630, %s595
        $region48: #{tpu_custom_call.1} parent=39 // pred_fallthru
          _
        // Predicated region
        $region49: #{tpu_custom_call.1} parent=39 // pred_check
          %p636 = pneg %p258
        $region50: #{tpu_custom_call.1} parent=39 // pred_check_branch
          %638 = sbr.rel (%p636) target = $region52
        $region51: #{tpu_custom_call.1} parent=39 // pred_region
          %s640 = ssub.s32 64, 64
          %641 = vsyncadd %s600, %s640
          %s642 = sadd.s32 %s32, %s30
          %s643 = smul.addr %s31, 4
          %s644 = sadd.s32 %s642, %s643
          %s645 = smul.addr %s644, 64
          %s646 = scalar_lea.hbm %s7, %s645
          %s648 = sshll.u32 %s603, 4
          %s649 = int_to_ptr.vmem [resolvable:$true] %s648
          %651 = dma.vmem_to_hbm [thread:$0]  %s649, 64, %s646, %s600
        $region52: #{tpu_custom_call.1} parent=39 // pred_fallthru
          _
      $region40: #{tpu_custom_call.1} parent=5 // pred_fallthru
        _
      %p652 = scmp.le.s32.totalorder 2, %s20
      // Predicated region
      $region53: #{tpu_custom_call.1} parent=5 // pred_check
        %p653 = pneg %p652
      $region54: #{tpu_custom_call.1} parent=5 // pred_check_branch
        %655 = sbr.rel (%p653) target = $region56
      $region55: #{tpu_custom_call.1} parent=5 // pred_region
        %s656 = ssub.s32 %s20, 2
        // Predicated region
        $region57: #{tpu_custom_call.1} parent=55 // pred_check
          %p657 = pneg %p204
        $region58: #{tpu_custom_call.1} parent=55 // pred_check_branch
          %659 = sbr.rel (%p657) target = $region60
        $region59: #{tpu_custom_call.1} parent=55 // pred_region
          %s660 = sand.u32 %s189, 1
          %s661 = scalar_lea.sflag [#allocation3], %s660
          %s662 = sand.u32 %s189, 1
          %s663 = smul.addr %s662, 4
          %s664 = scalar_lea.vmem [#allocation2], %s663
          %665 = dma.done %s661, 64
        $region60: #{tpu_custom_call.1} parent=55 // pred_fallthru
          _
        // Predicated region
        $region61: #{tpu_custom_call.1} parent=55 // pred_check
          %p666 = pneg %p234
        $region62: #{tpu_custom_call.1} parent=55 // pred_check_branch
          %668 = sbr.rel (%p666) target = $region64
        $region63: #{tpu_custom_call.1} parent=55 // pred_region
          %s669 = sand.u32 %s26, 1
          %s670 = scalar_lea.sflag [#allocation5], %s669
          %s671 = sand.u32 %s219, 1
          %s672 = smul.addr %s671, 4
          %s673 = scalar_lea.vmem [#allocation4], %s672
          %674 = dma.done %s670, 64
        $region64: #{tpu_custom_call.1} parent=55 // pred_fallthru
          _
        // Predicated region
        $region65: #{tpu_custom_call.1} parent=55 // pred_check
          %p675 = pneg %p264
        $region66: #{tpu_custom_call.1} parent=55 // pred_check_branch
          %677 = sbr.rel (%p675) target = $region68
        $region67: #{tpu_custom_call.1} parent=55 // pred_region
          %s678 = sand.u32 %s26, 1
          %s679 = scalar_lea.sflag [#allocation5], %s678
          %s680 = sand.u32 %s249, 1
          %s681 = smul.addr %s680, 4
          %s682 = scalar_lea.vmem [#allocation6], %s681
          %683 = dma.done %s679, 64
        $region68: #{tpu_custom_call.1} parent=55 // pred_fallthru
          _
      $region56: #{tpu_custom_call.1} parent=5 // pred_fallthru
        _
    $region6: #{tpu_custom_call.1} parent=1 // loop_footer
      %s24 = sadd.s32 1, %s20
    $region7: #{tpu_custom_call.1} parent=1 // loop_footer_branch
      %19 = sbr.rel target = $region3
    $region8: #{tpu_custom_call.1} parent=1 // loop_exit
      _
    %684 = vsyncpa [#allocation3], 1
    %s685 = scalar_lea.sflag [#allocation3], 1
    %686 = vsyncpa %s685, 1
    %687 = vsyncpa [#allocation5], 1
    %s688 = scalar_lea.sflag [#allocation5], 1
    %689 = vsyncpa %s688, 1

</llo_original>
